<compile_context>
chip_gen: v6e
topology: v6e:2x2x1
jax: 0.10.0
libtpu: 0.0.40
codegen_flags: <defaults>
</compile_context>

<pallas_src>
import jax
import jax.numpy as jnp
from jax.experimental import pallas as pl
from jax.experimental.pallas import tpu as pltpu

EPS = 1e-5
LANE = 128                       # lane-dense channel padding
VMEM_LIMIT = 48 * 1024 * 1024    # safe on v7x (64 MiB); raise to ~96 MB on v5e/v6e


def _round_up(n, m):
    return (n + m - 1) // m * m


# ---------------------------------------------------------------------------
# Kernels
# ---------------------------------------------------------------------------
def _make_conv1_kernel(stride, Ho, Wo, has_proj):
    """conv1 (3x3, stride) as 9 shifted matmuls + BN1 partial stats.

    Input is the stride-phase-split, zero-padded NHWC activation for one
    image: tap (kh,kw) is a contiguous (Ho,Wo) slice of phase (kh%s, kw%s).
    Optionally fuses the projection-shortcut 1x1 strided conv (its input is
    the (1,1) tap slice) and its BN partial stats.  Grid: one image per step.
    """
    HW = Ho * Wo
    taps = [(kh, kw) for kh in range(3) for kw in range(3)]

    def kernel(*refs):
        if has_proj:
            (x_ref, w1_ref, ws_ref,
             y1_ref, s1_ref, q1_ref, ys_ref, ss_ref, qs_ref) = refs
        else:
            x_ref, w1_ref, y1_ref, s1_ref, q1_ref = refs

        cout = y1_ref.shape[-1]
        acc = jnp.zeros((HW, cout), jnp.float32)
        for t, (kh, kw) in enumerate(taps):
            p = (kh % stride) * stride + (kw % stride)   # stride phase index
            r0, c0 = kh // stride, kw // stride          # offset inside phase
            patch = x_ref[p, r0:r0 + Ho, c0:c0 + Wo, :]
            patch = patch.reshape(HW, patch.shape[-1])
            acc = acc + jnp.dot(patch, w1_ref[t],
                                preferred_element_type=jnp.float32)

        y1_ref[...] = acc.reshape(y1_ref.shape).astype(y1_ref.dtype)
        s1_ref[...] = jnp.sum(acc, axis=0, keepdims=True).reshape(s1_ref.shape)
        q1_ref[...] = jnp.sum(acc * acc, axis=0,
                              keepdims=True).reshape(q1_ref.shape)

        if has_proj:
            # 1x1 strided projection conv: input == tap (1,1) slice.
            p = (1 % stride) * stride + (1 % stride)
            r0 = c0 = 1 // stride
            xs = x_ref[p, r0:r0 + Ho, c0:c0 + Wo, :]
            xs = xs.reshape(HW, xs.shape[-1])
            ysv = jnp.dot(xs, ws_ref[...], preferred_element_type=jnp.float32)
            ys_ref[...] = ysv.reshape(ys_ref.shape).astype(ys_ref.dtype)
            ss_ref[...] = jnp.sum(ysv, axis=0,
                                  keepdims=True).reshape(ss_ref.shape)
            qs_ref[...] = jnp.sum(ysv * ysv, axis=0,
                                  keepdims=True).reshape(qs_ref.shape)

    return kernel


def _make_conv2_kernel(Ho, Wo):
    """Fused bn1+ReLU apply -> conv2 (3x3, stride 1) + BN2 partial stats.

    The bn1-normalized activation is written into a zero-bordered VMEM
    scratch, so conv2's halo/padding never exists in HBM.  Grid: one image
    per step.
    """
    HW = Ho * Wo
    taps = [(kh, kw) for kh in range(3) for kw in range(3)]

    def kernel(y1_ref, sc1_ref, bi1_ref, w2_ref,
               y2_ref, s2_ref, q2_ref, hpad_ref):
        cout = y2_ref.shape[-1]
        # bn1 scale/bias + ReLU in f32, stored bf16 into the padded scratch.
        h1 = jnp.maximum(
            y1_ref[0].astype(jnp.float32) * sc1_ref[...] + bi1_ref[...], 0.0)
        hpad_ref[...] = jnp.zeros_like(hpad_ref)       # zero border each step
        hpad_ref[1:1 + Ho, 1:1 + Wo, :] = h1.astype(hpad_ref.dtype)

        acc = jnp.zeros((HW, cout), jnp.float32)
        for t, (kh, kw) in enumerate(taps):
            patch = hpad_ref[kh:kh + Ho, kw:kw + Wo, :].reshape(HW, cout)
            acc = acc + jnp.dot(patch, w2_ref[t],
                                preferred_element_type=jnp.float32)

        y2_ref[...] = acc.reshape(y2_ref.shape).astype(y2_ref.dtype)
        s2_ref[...] = jnp.sum(acc, axis=0, keepdims=True).reshape(s2_ref.shape)
        q2_ref[...] = jnp.sum(acc * acc, axis=0,
                              keepdims=True).reshape(q2_ref.shape)

    return kernel


def _bn_add_relu_id_kernel(y2_ref, xs_ref, sc2_ref, bi2_ref, o_ref):
    # out = relu(bn2(conv2) + x), identity shortcut (x fed as bf16).
    y = y2_ref[...].astype(jnp.float32)
    res = xs_ref[...].astype(jnp.float32)
    o_ref[...] = jnp.maximum(y * sc2_ref[...] + bi2_ref[...] + res,
                             0.0).astype(o_ref.dtype)


def _bn_add_relu_proj_kernel(y2_ref, ys_ref, sc2_ref, bi2_ref,
                             scs_ref, bis_ref, o_ref):
    # out = relu(bn2(conv2) + bn_s(conv1x1(x))), projection shortcut.
    main = y2_ref[...].astype(jnp.float32) * sc2_ref[...] + bi2_ref[...]
    short = ys_ref[...].astype(jnp.float32) * scs_ref[...] + bis_ref[...]
    o_ref[...] = jnp.maximum(main + short, 0.0).astype(o_ref.dtype)


# ---------------------------------------------------------------------------
# JAX glue: weight tap layout, stride-phase split, stats -> scale/bias
# ---------------------------------------------------------------------------
def _conv_w_taps(w_oihw, cin_p, cout_p):
    # torch conv weight (Co, Ci, kh, kw) -> (kh*kw, Ci_pad, Co_pad) bf16,
    # tap-major order matching the in-kernel (kh, kw) loop.
    co, ci, kh, kw = w_oihw.shape
    w = jnp.transpose(w_oihw, (2, 3, 1, 0)).reshape(kh * kw, ci, co)
    w = jnp.pad(w, ((0, 0), (0, cin_p - ci), (0, cout_p - co)))
    return w.astype(jnp.bfloat16)


def _bn_scale_bias(sum_vec, sq_vec, gamma_p, beta_p, count):
    # Training-mode batch statistics (biased variance), eps=1e-5, like
    # nn.BatchNorm2d.  Tiny O(C) math on the Pallas-accumulated partial sums.
    mean = sum_vec / count
    var = jnp.maximum(sq_vec / count - mean * mean, 0.0)
    scale = gamma_p * jax.lax.rsqrt(var + EPS)
    bias = beta_p - mean * scale
    return (scale[None, :].astype(jnp.float32),
            bias[None, :].astype(jnp.float32))


# ---------------------------------------------------------------------------
# BasicBlock forward
# ---------------------------------------------------------------------------
def basic_block_forward(x_nchw, params, stride):
    N, Cin, H, W = map(int, x_nchw.shape)
    Cp = int(params["w1"].shape[0])
    st = int(stride)
    has_proj = (st != 1) or (Cin != Cp)

    Cinp = _round_up(Cin, LANE)
    Cpp = _round_up(Cp, LANE)
    Ho = (H + 2 - 3) // st + 1
    Wo = (W + 2 - 3) // st + 1
    M = N * Ho * Wo                       # BN statistic count per channel
    n_ph = st * st

    x = jnp.transpose(x_nchw, (0, 2, 3, 1)).astype(jnp.float32)   # NHWC

    # Stride-phase split of the zero-padded input: tap (kh,kw) of the strided
    # 3x3 conv becomes a contiguous (Ho,Wo) window of phase (kh%st, kw%st) at
    # offset (kh//st, kw//st) -> no strided or 9x-expanded reads anywhere.
    xpad = jnp.pad(x, ((0, 0), (1, 1), (1, 1), (0, Cinp - Cin)))
    PH = 2 // st + Ho
    PW = 2 // st + Wo
    phases = []
    for ph in range(st):
        for pw in range(st):
            a = xpad[:, ph::st, pw::st, :][:, :PH, :PW, :]
            a = jnp.pad(a, ((0, 0), (0, PH - a.shape[1]),
                            (0, PW - a.shape[2]), (0, 0)))
            phases.append(a)
    xph = jnp.stack(phases, axis=1).reshape(N * n_ph, PH, PW, Cinp)
    xph = xph.astype(jnp.bfloat16)

    w1t = _conv_w_taps(params["w1"], Cinp, Cpp)                    # (9,Cinp,Cpp)

    cparams = pltpu.CompilerParams(dimension_semantics=("parallel",),
                                   vmem_limit_bytes=VMEM_LIMIT)

    y_spec = pl.BlockSpec((1, Ho, Wo, Cpp), lambda n: (n, 0, 0, 0))
    stat_shape = jax.ShapeDtypeStruct((N, 1, Cpp), jnp.float32)
    stat_spec = pl.BlockSpec((1, 1, Cpp), lambda n: (n, 0, 0))
    vec_spec = pl.BlockSpec((1, Cpp), lambda n: (0, 0))            # resident

    # ---- kernel 1: conv1 (+ fused 1x1 projection conv) + partial stats -----
    in_specs = [pl.BlockSpec((n_ph, PH, PW, Cinp), lambda n: (n, 0, 0, 0)),
                pl.BlockSpec((9, Cinp, Cpp), lambda n: (0, 0, 0))]
    inputs = [xph, w1t]
    out_shape = [jax.ShapeDtypeStruct((N, Ho, Wo, Cpp), jnp.bfloat16),
                 stat_shape, stat_shape]
    out_specs = [y_spec, stat_spec, stat_spec]
    if has_proj:
        wst = _conv_w_taps(params["ws"], Cinp, Cpp)[0]             # (Cinp,Cpp)
        in_specs.append(pl.BlockSpec((Cinp, Cpp), lambda n: (0, 0)))
        inputs.append(wst)
        out_shape += [jax.ShapeDtypeStruct((N, Ho, Wo, Cpp), jnp.bfloat16),
                      stat_shape, stat_shape]
        out_specs += [y_spec, stat_spec, stat_spec]

    res1 = pl.pallas_call(
        _make_conv1_kernel(st, Ho, Wo, has_proj),
        out_shape=tuple(out_shape),
        grid=(N,),
        in_specs=in_specs,
        out_specs=tuple(out_specs),
        compiler_params=cparams,
    )(*inputs)
    if has_proj:
        y1, s1p, q1p, ys, ssp, qsp = res1
    else:
        y1, s1p, q1p = res1

    g1p = jnp.pad(params["g1"], (0, Cpp - Cp))
    b1p = jnp.pad(params["b1"], (0, Cpp - Cp))
    sc1, bi1 = _bn_scale_bias(jnp.sum(s1p, axis=(0, 1)),
                              jnp.sum(q1p, axis=(0, 1)), g1p, b1p, M)

    # ---- kernel 2: fused bn1+relu -> conv2 + BN2 partial stats -------------
    w2t = _conv_w_taps(params["w2"], Cpp, Cpp)                     # (9,Cpp,Cpp)
    y2, s2p, q2p = pl.pallas_call(
        _make_conv2_kernel(Ho, Wo),
        out_shape=(jax.ShapeDtypeStruct((N, Ho, Wo, Cpp), jnp.bfloat16),
                   stat_shape, stat_shape),
        grid=(N,),
        in_specs=[y_spec, vec_spec, vec_spec,
                  pl.BlockSpec((9, Cpp, Cpp), lambda n: (0, 0, 0))],
        out_specs=(y_spec, stat_spec, stat_spec),
        scratch_shapes=[pltpu.VMEM((Ho + 2, Wo + 2, Cpp), jnp.bfloat16)],
        compiler_params=cparams,
    )(y1, sc1, bi1, w2t)

    g2p = jnp.pad(params["g2"], (0, Cpp - Cp))
    b2p = jnp.pad(params["b2"], (0, Cpp - Cp))
    sc2, bi2 = _bn_scale_bias(jnp.sum(s2p, axis=(0, 1)),
                              jnp.sum(q2p, axis=(0, 1)), g2p, b2p, M)

    # ---- kernel 3: bn2 + shortcut + residual add + relu --------------------
    if has_proj:
        gsp = jnp.pad(params["gs"], (0, Cpp - Cp))
        bsp = jnp.pad(params["bs"], (0, Cpp - Cp))
        scs, bis = _bn_scale_bias(jnp.sum(ssp, axis=(0, 1)),
                                  jnp.sum(qsp, axis=(0, 1)), gsp, bsp, M)
        out = pl.pallas_call(
            _bn_add_relu_proj_kernel,
            out_shape=jax.ShapeDtypeStruct((N, Ho, Wo, Cpp), jnp.float32),
            grid=(N,),
            in_specs=[y_spec, y_spec, vec_spec, vec_spec, vec_spec, vec_spec],
            out_specs=y_spec,
            compiler_params=cparams,
        )(y2, ys, sc2, bi2, scs, bis)
    else:
        xs = jnp.pad(x, ((0, 0), (0, 0), (0, 0),
                         (0, Cpp - Cin))).astype(jnp.bfloat16)     # bf16 residual
        out = pl.pallas_call(
            _bn_add_relu_id_kernel,
            out_shape=jax.ShapeDtypeStruct((N, Ho, Wo, Cpp), jnp.float32),
            grid=(N,),
            in_specs=[y_spec, y_spec, vec_spec, vec_spec],
            out_specs=y_spec,
            compiler_params=cparams,
        )(y2, xs, sc2, bi2)

    return jnp.transpose(out[..., :Cp], (0, 3, 1, 2))              # back to NCHW


# ---------------------------------------------------------------------------
# Deterministic parameter init (shapes per BasicBlock.__init__)
# ---------------------------------------------------------------------------
def init_params(key, in_planes, planes, stride):
    ks = jax.random.split(key, 8)
    params = {
        "w1": 0.2 * jax.random.normal(ks[0], (planes, in_planes, 3, 3), jnp.float32),
        "g1": 1.0 + 0.1 * jax.random.normal(ks[1], (planes,), jnp.float32),
        "b1": 0.1 * jax.random.normal(ks[2], (planes,), jnp.float32),
        "w2": 0.2 * jax.random.normal(ks[3], (planes, planes, 3, 3), jnp.float32),
        "g2": 1.0 + 0.1 * jax.random.normal(ks[4], (planes,), jnp.float32),
        "b2": 0.1 * jax.random.normal(ks[5], (planes,), jnp.float32),
    }
    if stride != 1 or in_planes != planes:
        params["ws"] = 0.2 * jax.random.normal(ks[6], (planes, in_planes, 1, 1), jnp.float32)
        params["gs"] = 1.0 + 0.05 * jax.random.normal(ks[7], (planes,), jnp.float32)
        params["bs"] = 0.05 * jnp.ones((planes,), jnp.float32)
    return params


# ---------------------------------------------------------------------------
# Pure-JAX f32 reference (sanity check)
# ---------------------------------------------------------------------------
def reference_forward(x_nchw, params, stride):
    def conv(x, w, s):
        pad = [(1, 1), (1, 1)] if w.shape[-1] == 3 else [(0, 0), (0, 0)]
        return jax.lax.conv_general_dilated(
            x, w, window_strides=(s, s), padding=pad,
            dimension_numbers=("NCHW", "OIHW", "NCHW"),
            precision=jax.lax.Precision.HIGHEST)

    def bn(y, g, b):
        mean = jnp.mean(y, axis=(0, 2, 3), keepdims=True)
        var = jnp.mean((y - mean) ** 2, axis=(0, 2, 3), keepdims=True)
        return ((y - mean) * jax.lax.rsqrt(var + EPS)
                * g[None, :, None, None] + b[None, :, None, None])

    out = jax.nn.relu(bn(conv(x_nchw, params["w1"], stride), params["g1"], params["b1"]))
    out = bn(conv(out, params["w2"], 1), params["g2"], params["b2"])
    if "ws" in params:
        short = bn(conv(x_nchw, params["ws"], stride), params["gs"], params["bs"])
    else:
        short = x_nchw
    return jax.nn.relu(out + short)


# ---------------------------------------------------------------------------
if __name__ == "__main__":
    key = jax.random.PRNGKey(0)
    kx, kp1, kp2 = jax.random.split(key, 3)

    x = jax.random.normal(kx, (2, 4, 16, 16), jnp.float32)

    # Kernel uses bf16 MXU matmuls (f32 accumulation) and bf16 intermediate
    # activations; reference is f32 HIGHEST, so tolerance matches the expected
    # bf16 deviation.
    TOL = 5e-2

    # Case 1: projection shortcut (stride=2, 4 -> 8 channels).
    params = init_params(kp1, in_planes=4, planes=8, stride=2)
    out = jax.block_until_ready(basic_block_forward(x, params, stride=2))
    ref = reference_forward(x, params, 2)
    assert out.shape == (2, 8, 8, 8), out.shape
    assert jnp.allclose(out, ref, atol=TOL, rtol=TOL), \
        float(jnp.max(jnp.abs(out - ref)))

    # Case 2: identity shortcut (stride=1, 4 -> 4 channels).
    params_id = init_params(kp2, in_planes=4, planes=4, stride=1)
    out_id = jax.block_until_ready(basic_block_forward(x, params_id, stride=1))
    ref_id = reference_forward(x, params_id, 1)
    assert out_id.shape == (2, 4, 16, 16), out_id.shape
    assert jnp.allclose(out_id, ref_id, atol=TOL, rtol=TOL), \
        float(jnp.max(jnp.abs(out_id - ref_id)))

    print("KERNEL_OK")
</pallas_src>

<mosaic_0001>
module attributes {stable_mosaic.version = 11 : i64} {
  func.func @kernel(%arg0: i32, %arg1: memref<4x9x9x128xbf16, #tpu.memory_space<vmem>>, %arg2: memref<9x128x128xbf16, #tpu.memory_space<vmem>>, %arg3: memref<128x128xbf16, #tpu.memory_space<vmem>>, %arg4: memref<1x8x8x128xbf16, #tpu.memory_space<vmem>>, %arg5: memref<1x1x128xf32, #tpu.memory_space<vmem>>, %arg6: memref<1x1x128xf32, #tpu.memory_space<vmem>>, %arg7: memref<1x8x8x128xbf16, #tpu.memory_space<vmem>>, %arg8: memref<1x1x128xf32, #tpu.memory_space<vmem>>, %arg9: memref<1x1x128xf32, #tpu.memory_space<vmem>>) attributes {dimension_semantics = [#tpu.dimension_semantics<parallel>], iteration_bounds = array<i64: 2>, scalar_prefetch = 0 : i64, scratch_operands = 0 : i64, tpu.core_type = #tpu.core_type<tc>, window_params = [{transform_indices = @transform_0, window_bounds = array<i64: 4, 9, 9, 128>}, {pipeline_mode = #tpu.pipeline_mode<synchronous>, transform_indices = @transform_1, window_bounds = array<i64: 9, 128, 128>}, {pipeline_mode = #tpu.pipeline_mode<synchronous>, transform_indices = @transform_2, window_bounds = array<i64: 128, 128>}, {transform_indices = @transform_3, window_bounds = array<i64: 1, 8, 8, 128>}, {transform_indices = @transform_4, window_bounds = array<i64: 1, 1, 128>}, {transform_indices = @transform_5, window_bounds = array<i64: 1, 1, 128>}, {transform_indices = @transform_6, window_bounds = array<i64: 1, 8, 8, 128>}, {transform_indices = @transform_7, window_bounds = array<i64: 1, 1, 128>}, {transform_indices = @transform_8, window_bounds = array<i64: 1, 1, 128>}]} {
    %cst = arith.constant 0.000000e+00 : f32
    %0 = vector.broadcast %cst : f32 to vector<64x128xf32>
    %c0 = arith.constant 0 : index
    %c0_0 = arith.constant 0 : index
    %c0_1 = arith.constant 0 : index
    %c0_2 = arith.constant 0 : index
    %1 = vector.load %arg1[%c0, %c0_0, %c0_1, %c0_2] : memref<4x9x9x128xbf16, #tpu.memory_space<vmem>>, vector<1x8x8x128xbf16>
    %2 = vector.shape_cast %1 : vector<1x8x8x128xbf16> to vector<8x8x128xbf16>
    %3 = vector.shape_cast %2 : vector<8x8x128xbf16> to vector<64x128xbf16>
    %c0_3 = arith.constant 0 : index
    %c0_4 = arith.constant 0 : index
    %c0_5 = arith.constant 0 : index
    %4 = vector.load %arg2[%c0_3, %c0_4, %c0_5] : memref<9x128x128xbf16, #tpu.memory_space<vmem>>, vector<1x128x128xbf16>
    %5 = vector.shape_cast %4 : vector<1x128x128xbf16> to vector<128x128xbf16>
    %cst_6 = arith.constant dense<0.000000e+00> : vector<64x128xf32>
    %6 = tpu.matmul %3, %5, %cst_6 {dimension_numbers = #tpu.dot_dimension_numbers<[1], [0], [0], [1], [0, 0, 1, 1], [], []>} : vector<64x128xbf16>, vector<128x128xbf16>, vector<64x128xf32> -> vector<64x128xf32>
    %7 = arith.addf %0, %6 : vector<64x128xf32>
    %c1 = arith.constant 1 : index
    %c0_7 = arith.constant 0 : index
    %c0_8 = arith.constant 0 : index
    %c0_9 = arith.constant 0 : index
    %8 = vector.load %arg1[%c1, %c0_7, %c0_8, %c0_9] : memref<4x9x9x128xbf16, #tpu.memory_space<vmem>>, vector<1x8x8x128xbf16>
    %9 = vector.shape_cast %8 : vector<1x8x8x128xbf16> to vector<8x8x128xbf16>
    %10 = vector.shape_cast %9 : vector<8x8x128xbf16> to vector<64x128xbf16>
    %c1_10 = arith.constant 1 : index
    %c0_11 = arith.constant 0 : index
    %c0_12 = arith.constant 0 : index
    %11 = vector.load %arg2[%c1_10, %c0_11, %c0_12] : memref<9x128x128xbf16, #tpu.memory_space<vmem>>, vector<1x128x128xbf16>
    %12 = vector.shape_cast %11 : vector<1x128x128xbf16> to vector<128x128xbf16>
    %cst_13 = arith.constant dense<0.000000e+00> : vector<64x128xf32>
    %13 = tpu.matmul %10, %12, %cst_13 {dimension_numbers = #tpu.dot_dimension_numbers<[1], [0], [0], [1], [0, 0, 1, 1], [], []>} : vector<64x128xbf16>, vector<128x128xbf16>, vector<64x128xf32> -> vector<64x128xf32>
    %14 = arith.addf %7, %13 : vector<64x128xf32>
    %c0_14 = arith.constant 0 : index
    %c0_15 = arith.constant 0 : index
    %c1_16 = arith.constant 1 : index
    %c0_17 = arith.constant 0 : index
    %15 = vector.load %arg1[%c0_14, %c0_15, %c1_16, %c0_17] : memref<4x9x9x128xbf16, #tpu.memory_space<vmem>>, vector<1x8x8x128xbf16>
    %16 = vector.shape_cast %15 : vector<1x8x8x128xbf16> to vector<8x8x128xbf16>
    %17 = vector.shape_cast %16 : vector<8x8x128xbf16> to vector<64x128xbf16>
    %c2 = arith.constant 2 : index
    %c0_18 = arith.constant 0 : index
    %c0_19 = arith.constant 0 : index
    %18 = vector.load %arg2[%c2, %c0_18, %c0_19] : memref<9x128x128xbf16, #tpu.memory_space<vmem>>, vector<1x128x128xbf16>
    %19 = vector.shape_cast %18 : vector<1x128x128xbf16> to vector<128x128xbf16>
    %cst_20 = arith.constant dense<0.000000e+00> : vector<64x128xf32>
    %20 = tpu.matmul %17, %19, %cst_20 {dimension_numbers = #tpu.dot_dimension_numbers<[1], [0], [0], [1], [0, 0, 1, 1], [], []>} : vector<64x128xbf16>, vector<128x128xbf16>, vector<64x128xf32> -> vector<64x128xf32>
    %21 = arith.addf %14, %20 : vector<64x128xf32>
    %c2_21 = arith.constant 2 : index
    %c0_22 = arith.constant 0 : index
    %c0_23 = arith.constant 0 : index
    %c0_24 = arith.constant 0 : index
    %22 = vector.load %arg1[%c2_21, %c0_22, %c0_23, %c0_24] : memref<4x9x9x128xbf16, #tpu.memory_space<vmem>>, vector<1x8x8x128xbf16>
    %23 = vector.shape_cast %22 : vector<1x8x8x128xbf16> to vector<8x8x128xbf16>
    %24 = vector.shape_cast %23 : vector<8x8x128xbf16> to vector<64x128xbf16>
    %c3 = arith.constant 3 : index
    %c0_25 = arith.constant 0 : index
    %c0_26 = arith.constant 0 : index
    %25 = vector.load %arg2[%c3, %c0_25, %c0_26] : memref<9x128x128xbf16, #tpu.memory_space<vmem>>, vector<1x128x128xbf16>
    %26 = vector.shape_cast %25 : vector<1x128x128xbf16> to vector<128x128xbf16>
    %cst_27 = arith.constant dense<0.000000e+00> : vector<64x128xf32>
    %27 = tpu.matmul %24, %26, %cst_27 {dimension_numbers = #tpu.dot_dimension_numbers<[1], [0], [0], [1], [0, 0, 1, 1], [], []>} : vector<64x128xbf16>, vector<128x128xbf16>, vector<64x128xf32> -> vector<64x128xf32>
    %28 = arith.addf %21, %27 : vector<64x128xf32>
    %c3_28 = arith.constant 3 : index
    %c0_29 = arith.constant 0 : index
    %c0_30 = arith.constant 0 : index
    %c0_31 = arith.constant 0 : index
    %29 = vector.load %arg1[%c3_28, %c0_29, %c0_30, %c0_31] : memref<4x9x9x128xbf16, #tpu.memory_space<vmem>>, vector<1x8x8x128xbf16>
    %30 = vector.shape_cast %29 : vector<1x8x8x128xbf16> to vector<8x8x128xbf16>
    %31 = vector.shape_cast %30 : vector<8x8x128xbf16> to vector<64x128xbf16>
    %c4 = arith.constant 4 : index
    %c0_32 = arith.constant 0 : index
    %c0_33 = arith.constant 0 : index
    %32 = vector.load %arg2[%c4, %c0_32, %c0_33] : memref<9x128x128xbf16, #tpu.memory_space<vmem>>, vector<1x128x128xbf16>
    %33 = vector.shape_cast %32 : vector<1x128x128xbf16> to vector<128x128xbf16>
    %cst_34 = arith.constant dense<0.000000e+00> : vector<64x128xf32>
    %34 = tpu.matmul %31, %33, %cst_34 {dimension_numbers = #tpu.dot_dimension_numbers<[1], [0], [0], [1], [0, 0, 1, 1], [], []>} : vector<64x128xbf16>, vector<128x128xbf16>, vector<64x128xf32> -> vector<64x128xf32>
    %35 = arith.addf %28, %34 : vector<64x128xf32>
    %c2_35 = arith.constant 2 : index
    %c0_36 = arith.constant 0 : index
    %c1_37 = arith.constant 1 : index
    %c0_38 = arith.constant 0 : index
    %36 = vector.load %arg1[%c2_35, %c0_36, %c1_37, %c0_38] : memref<4x9x9x128xbf16, #tpu.memory_space<vmem>>, vector<1x8x8x128xbf16>
    %37 = vector.shape_cast %36 : vector<1x8x8x128xbf16> to vector<8x8x128xbf16>
    %38 = vector.shape_cast %37 : vector<8x8x128xbf16> to vector<64x128xbf16>
    %c5 = arith.constant 5 : index
    %c0_39 = arith.constant 0 : index
    %c0_40 = arith.constant 0 : index
    %39 = vector.load %arg2[%c5, %c0_39, %c0_40] : memref<9x128x128xbf16, #tpu.memory_space<vmem>>, vector<1x128x128xbf16>
    %40 = vector.shape_cast %39 : vector<1x128x128xbf16> to vector<128x128xbf16>
    %cst_41 = arith.constant dense<0.000000e+00> : vector<64x128xf32>
    %41 = tpu.matmul %38, %40, %cst_41 {dimension_numbers = #tpu.dot_dimension_numbers<[1], [0], [0], [1], [0, 0, 1, 1], [], []>} : vector<64x128xbf16>, vector<128x128xbf16>, vector<64x128xf32> -> vector<64x128xf32>
    %42 = arith.addf %35, %41 : vector<64x128xf32>
    %c0_42 = arith.constant 0 : index
    %c1_43 = arith.constant 1 : index
    %c0_44 = arith.constant 0 : index
    %c0_45 = arith.constant 0 : index
    %43 = vector.load %arg1[%c0_42, %c1_43, %c0_44, %c0_45] : memref<4x9x9x128xbf16, #tpu.memory_space<vmem>>, vector<1x8x8x128xbf16>
    %44 = vector.shape_cast %43 : vector<1x8x8x128xbf16> to vector<8x8x128xbf16>
    %45 = vector.shape_cast %44 : vector<8x8x128xbf16> to vector<64x128xbf16>
    %c6 = arith.constant 6 : index
    %c0_46 = arith.constant 0 : index
    %c0_47 = arith.constant 0 : index
    %46 = vector.load %arg2[%c6, %c0_46, %c0_47] : memref<9x128x128xbf16, #tpu.memory_space<vmem>>, vector<1x128x128xbf16>
    %47 = vector.shape_cast %46 : vector<1x128x128xbf16> to vector<128x128xbf16>
    %cst_48 = arith.constant dense<0.000000e+00> : vector<64x128xf32>
    %48 = tpu.matmul %45, %47, %cst_48 {dimension_numbers = #tpu.dot_dimension_numbers<[1], [0], [0], [1], [0, 0, 1, 1], [], []>} : vector<64x128xbf16>, vector<128x128xbf16>, vector<64x128xf32> -> vector<64x128xf32>
    %49 = arith.addf %42, %48 : vector<64x128xf32>
    %c1_49 = arith.constant 1 : index
    %c1_50 = arith.constant 1 : index
    %c0_51 = arith.constant 0 : index
    %c0_52 = arith.constant 0 : index
    %50 = vector.load %arg1[%c1_49, %c1_50, %c0_51, %c0_52] : memref<4x9x9x128xbf16, #tpu.memory_space<vmem>>, vector<1x8x8x128xbf16>
    %51 = vector.shape_cast %50 : vector<1x8x8x128xbf16> to vector<8x8x128xbf16>
    %52 = vector.shape_cast %51 : vector<8x8x128xbf16> to vector<64x128xbf16>
    %c7 = arith.constant 7 : index
    %c0_53 = arith.constant 0 : index
    %c0_54 = arith.constant 0 : index
    %53 = vector.load %arg2[%c7, %c0_53, %c0_54] : memref<9x128x128xbf16, #tpu.memory_space<vmem>>, vector<1x128x128xbf16>
    %54 = vector.shape_cast %53 : vector<1x128x128xbf16> to vector<128x128xbf16>
    %cst_55 = arith.constant dense<0.000000e+00> : vector<64x128xf32>
    %55 = tpu.matmul %52, %54, %cst_55 {dimension_numbers = #tpu.dot_dimension_numbers<[1], [0], [0], [1], [0, 0, 1, 1], [], []>} : vector<64x128xbf16>, vector<128x128xbf16>, vector<64x128xf32> -> vector<64x128xf32>
    %56 = arith.addf %49, %55 : vector<64x128xf32>
    %c0_56 = arith.constant 0 : index
    %c1_57 = arith.constant 1 : index
    %c1_58 = arith.constant 1 : index
    %c0_59 = arith.constant 0 : index
    %57 = vector.load %arg1[%c0_56, %c1_57, %c1_58, %c0_59] : memref<4x9x9x128xbf16, #tpu.memory_space<vmem>>, vector<1x8x8x128xbf16>
    %58 = vector.shape_cast %57 : vector<1x8x8x128xbf16> to vector<8x8x128xbf16>
    %59 = vector.shape_cast %58 : vector<8x8x128xbf16> to vector<64x128xbf16>
    %c8 = arith.constant 8 : index
    %c0_60 = arith.constant 0 : index
    %c0_61 = arith.constant 0 : index
    %60 = vector.load %arg2[%c8, %c0_60, %c0_61] : memref<9x128x128xbf16, #tpu.memory_space<vmem>>, vector<1x128x128xbf16>
    %61 = vector.shape_cast %60 : vector<1x128x128xbf16> to vector<128x128xbf16>
    %cst_62 = arith.constant dense<0.000000e+00> : vector<64x128xf32>
    %62 = tpu.matmul %59, %61, %cst_62 {dimension_numbers = #tpu.dot_dimension_numbers<[1], [0], [0], [1], [0, 0, 1, 1], [], []>} : vector<64x128xbf16>, vector<128x128xbf16>, vector<64x128xf32> -> vector<64x128xf32>
    %63 = arith.addf %56, %62 : vector<64x128xf32>
    %64 = vector.shape_cast %63 : vector<64x128xf32> to vector<1x8x8x128xf32>
    %65 = arith.truncf %64 : vector<1x8x8x128xf32> to vector<1x8x8x128xbf16>
    %c0_63 = arith.constant 0 : index
    %c0_64 = arith.constant 0 : index
    %c0_65 = arith.constant 0 : index
    %c0_66 = arith.constant 0 : index
    %66 = vector.load %arg4[%c0_63, %c0_64, %c0_65, %c0_66] : memref<1x8x8x128xbf16, #tpu.memory_space<vmem>>, vector<1x8x8x128xbf16>
    tpu.vector_store %arg4[%c0_63, %c0_64, %c0_65, %c0_66], %65 {strides = array<i32>} : memref<1x8x8x128xbf16, #tpu.memory_space<vmem>>, vector<1x8x8x128xbf16>,
    %cst_67 = arith.constant dense<0.000000e+00> : vector<128xf32>
    %67 = vector.multi_reduction <add>, %63, %cst_67 [0] : vector<64x128xf32> to vector<128xf32>
    %68 = vector.shape_cast %67 : vector<128xf32> to vector<1x128xf32>
    %69 = vector.shape_cast %68 : vector<1x128xf32> to vector<1x1x128xf32>
    %c0_68 = arith.constant 0 : index
    %c0_69 = arith.constant 0 : index
    %c0_70 = arith.constant 0 : index
    %70 = vector.load %arg5[%c0_68, %c0_69, %c0_70] : memref<1x1x128xf32, #tpu.memory_space<vmem>>, vector<1x1x128xf32>
    tpu.vector_store %arg5[%c0_68, %c0_69, %c0_70], %69 {strides = array<i32>} : memref<1x1x128xf32, #tpu.memory_space<vmem>>, vector<1x1x128xf32>,
    %71 = arith.mulf %63, %63 : vector<64x128xf32>
    %cst_71 = arith.constant dense<0.000000e+00> : vector<128xf32>
    %72 = vector.multi_reduction <add>, %71, %cst_71 [0] : vector<64x128xf32> to vector<128xf32>
    %73 = vector.shape_cast %72 : vector<128xf32> to vector<1x128xf32>
    %74 = vector.shape_cast %73 : vector<1x128xf32> to vector<1x1x128xf32>
    %c0_72 = arith.constant 0 : index
    %c0_73 = arith.constant 0 : index
    %c0_74 = arith.constant 0 : index
    %75 = vector.load %arg6[%c0_72, %c0_73, %c0_74] : memref<1x1x128xf32, #tpu.memory_space<vmem>>, vector<1x1x128xf32>
    tpu.vector_store %arg6[%c0_72, %c0_73, %c0_74], %74 {strides = array<i32>} : memref<1x1x128xf32, #tpu.memory_space<vmem>>, vector<1x1x128xf32>,
    %c3_75 = arith.constant 3 : index
    %c0_76 = arith.constant 0 : index
    %c0_77 = arith.constant 0 : index
    %c0_78 = arith.constant 0 : index
    %76 = vector.load %arg1[%c3_75, %c0_76, %c0_77, %c0_78] : memref<4x9x9x128xbf16, #tpu.memory_space<vmem>>, vector<1x8x8x128xbf16>
    %77 = vector.shape_cast %76 : vector<1x8x8x128xbf16> to vector<8x8x128xbf16>
    %78 = vector.shape_cast %77 : vector<8x8x128xbf16> to vector<64x128xbf16>
    %c0_79 = arith.constant 0 : index
    %c0_80 = arith.constant 0 : index
    %79 = vector.load %arg3[%c0_79, %c0_80] : memref<128x128xbf16, #tpu.memory_space<vmem>>, vector<128x128xbf16>
    %cst_81 = arith.constant dense<0.000000e+00> : vector<64x128xf32>
    %80 = tpu.matmul %78, %79, %cst_81 {dimension_numbers = #tpu.dot_dimension_numbers<[1], [0], [0], [1], [0, 0, 1, 1], [], []>} : vector<64x128xbf16>, vector<128x128xbf16>, vector<64x128xf32> -> vector<64x128xf32>
    %81 = vector.shape_cast %80 : vector<64x128xf32> to vector<1x8x8x128xf32>
    %82 = arith.truncf %81 : vector<1x8x8x128xf32> to vector<1x8x8x128xbf16>
    %c0_82 = arith.constant 0 : index
    %c0_83 = arith.constant 0 : index
    %c0_84 = arith.constant 0 : index
    %c0_85 = arith.constant 0 : index
    %83 = vector.load %arg7[%c0_82, %c0_83, %c0_84, %c0_85] : memref<1x8x8x128xbf16, #tpu.memory_space<vmem>>, vector<1x8x8x128xbf16>
    tpu.vector_store %arg7[%c0_82, %c0_83, %c0_84, %c0_85], %82 {strides = array<i32>} : memref<1x8x8x128xbf16, #tpu.memory_space<vmem>>, vector<1x8x8x128xbf16>,
    %cst_86 = arith.constant dense<0.000000e+00> : vector<128xf32>
    %84 = vector.multi_reduction <add>, %80, %cst_86 [0] : vector<64x128xf32> to vector<128xf32>
    %85 = vector.shape_cast %84 : vector<128xf32> to vector<1x128xf32>
    %86 = vector.shape_cast %85 : vector<1x128xf32> to vector<1x1x128xf32>
    %c0_87 = arith.constant 0 : index
    %c0_88 = arith.constant 0 : index
    %c0_89 = arith.constant 0 : index
    %87 = vector.load %arg8[%c0_87, %c0_88, %c0_89] : memref<1x1x128xf32, #tpu.memory_space<vmem>>, vector<1x1x128xf32>
    tpu.vector_store %arg8[%c0_87, %c0_88, %c0_89], %86 {strides = array<i32>} : memref<1x1x128xf32, #tpu.memory_space<vmem>>, vector<1x1x128xf32>,
    %88 = arith.mulf %80, %80 : vector<64x128xf32>
    %cst_90 = arith.constant dense<0.000000e+00> : vector<128xf32>
    %89 = vector.multi_reduction <add>, %88, %cst_90 [0] : vector<64x128xf32> to vector<128xf32>
    %90 = vector.shape_cast %89 : vector<128xf32> to vector<1x128xf32>
    %91 = vector.shape_cast %90 : vector<1x128xf32> to vector<1x1x128xf32>
    %c0_91 = arith.constant 0 : index
    %c0_92 = arith.constant 0 : index
    %c0_93 = arith.constant 0 : index
    %92 = vector.load %arg9[%c0_91, %c0_92, %c0_93] : memref<1x1x128xf32, #tpu.memory_space<vmem>>, vector<1x1x128xf32>
    tpu.vector_store %arg9[%c0_91, %c0_92, %c0_93], %91 {strides = array<i32>} : memref<1x1x128xf32, #tpu.memory_space<vmem>>, vector<1x1x128xf32>,
    return
  }
  func.func @transform_0(%arg0: i32) -> (i32, i32, i32, i32) {
    %c0_i32 = arith.constant 0 : i32
    %c0_i32_0 = arith.constant 0 : i32
    %c0_i32_1 = arith.constant 0 : i32
    %c0_i32_2 = arith.constant 0 : i32
    return %arg0, %c0_i32, %c0_i32_0, %c0_i32_1 : i32, i32, i32, i32
  }
  func.func @transform_1(%arg0: i32) -> (i32, i32, i32) {
    %c0_i32 = arith.constant 0 : i32
    %c0_i32_0 = arith.constant 0 : i32
    %c0_i32_1 = arith.constant 0 : i32
    %c0_i32_2 = arith.constant 0 : i32
    return %c0_i32, %c0_i32_0, %c0_i32_1 : i32, i32, i32
  }
  func.func @transform_2(%arg0: i32) -> (i32, i32) {
    %c0_i32 = arith.constant 0 : i32
    %c0_i32_0 = arith.constant 0 : i32
    %c0_i32_1 = arith.constant 0 : i32
    return %c0_i32, %c0_i32_0 : i32, i32
  }
  func.func @transform_3(%arg0: i32) -> (i32, i32, i32, i32) {
    %c0_i32 = arith.constant 0 : i32
    %c0_i32_0 = arith.constant 0 : i32
    %c0_i32_1 = arith.constant 0 : i32
    %c0_i32_2 = arith.constant 0 : i32
    return %arg0, %c0_i32, %c0_i32_0, %c0_i32_1 : i32, i32, i32, i32
  }
  func.func @transform_4(%arg0: i32) -> (i32, i32, i32) {
    %c0_i32 = arith.constant 0 : i32
    %c0_i32_0 = arith.constant 0 : i32
    %c0_i32_1 = arith.constant 0 : i32
    return %arg0, %c0_i32, %c0_i32_0 : i32, i32, i32
  }
  func.func @transform_5(%arg0: i32) -> (i32, i32, i32) {
    %c0_i32 = arith.constant 0 : i32
    %c0_i32_0 = arith.constant 0 : i32
    %c0_i32_1 = arith.constant 0 : i32
    return %arg0, %c0_i32, %c0_i32_0 : i32, i32, i32
  }
  func.func @transform_6(%arg0: i32) -> (i32, i32, i32, i32) {
    %c0_i32 = arith.constant 0 : i32
    %c0_i32_0 = arith.constant 0 : i32
    %c0_i32_1 = arith.constant 0 : i32
    %c0_i32_2 = arith.constant 0 : i32
    return %arg0, %c0_i32, %c0_i32_0, %c0_i32_1 : i32, i32, i32, i32
  }
  func.func @transform_7(%arg0: i32) -> (i32, i32, i32) {
    %c0_i32 = arith.constant 0 : i32
    %c0_i32_0 = arith.constant 0 : i32
    %c0_i32_1 = arith.constant 0 : i32
    return %arg0, %c0_i32, %c0_i32_0 : i32, i32, i32
  }
  func.func @transform_8(%arg0: i32) -> (i32, i32, i32) {
    %c0_i32 = arith.constant 0 : i32
    %c0_i32_0 = arith.constant 0 : i32
    %c0_i32_1 = arith.constant 0 : i32
    return %arg0, %c0_i32, %c0_i32_0 : i32, i32, i32
  }
}

</mosaic_0001>

<llo_original>
// kernel: tpu_custom_call.1
$region0: #{tpu_custom_call.1}
  #allocation0 [shape = 'u32[]', space=smem, size = 0x4, offset = 0x4, fixed_abs, tag = 'smem constant byte address 0x4 - core index']
  #allocation1 [shape = 'u32[144,128]{1,0:T(1,128)}', space=vmem, size = 0x12000, scoped, tag = 'internal scratch']
  %s0 = inlined_call_operand.vmem [shape: bf16[8,9,9,128], index: 0, kind: input, shape index: {}]
  %s1 = inlined_call_operand.vmem [shape: bf16[9,128,128], index: 1, kind: input, shape index: {}]
  %s2 = inlined_call_operand.vmem [shape: bf16[128,128], index: 2, kind: input, shape index: {}]
  %s3 = inlined_call_operand.hbm [shape: bf16[2,8,8,128], index: 3, kind: output, shape index: {0}]
  %s4 = inlined_call_operand.hbm [shape: f32[2,1,128], index: 4, kind: output, shape index: {1}]
  %s5 = inlined_call_operand.hbm [shape: f32[2,1,128], index: 5, kind: output, shape index: {2}]
  %s6 = inlined_call_operand.hbm [shape: bf16[2,8,8,128], index: 6, kind: output, shape index: {3}]
  %s7 = inlined_call_operand.hbm [shape: f32[2,1,128], index: 7, kind: output, shape index: {4}]
  %s8 = inlined_call_operand.hbm [shape: f32[2,1,128], index: 8, kind: output, shape index: {5}]
  %9 = xla_tuple %s3, %s4, %s5, %s6, %s7, %s8
  %s10 = sld [smem:[#allocation0]]
  $region85: #{tpu_custom_call.1} parent=0
    _
  %s12 = ssub.s32 1, %s10
  %s13 = scalar_select 0, %s12, %s10
  $region1: #{tpu_custom_call.1} parent=0
    #allocation2 [shape = 'u8[32768]{0}', space=vmem, size = 0x8000, scoped, tag = 'output window, operand 0']
    #allocation3 [shape = 's32[2]{0}', space=sflag, size = 0x8, scoped, tag = 'scoped memory for tpu_custom_call.1']
    #allocation4 [shape = 'u8[1024]{0}', space=vmem, size = 0x400, scoped, tag = 'output window, operand 1']
    #allocation5 [shape = 's32[2]{0}', space=sflag, size = 0x8, scoped, tag = 'scoped memory for tpu_custom_call.1']
    #allocation6 [shape = 'u8[1024]{0}', space=vmem, size = 0x400, scoped, tag = 'output window, operand 2']
    #allocation7 [shape = 'u8[32768]{0}', space=vmem, size = 0x8000, scoped, tag = 'output window, operand 3']
    #allocation8 [shape = 's32[2]{0}', space=sflag, size = 0x8, scoped, tag = 'scoped memory for tpu_custom_call.1']
    #allocation9 [shape = 'u8[1024]{0}', space=vmem, size = 0x400, scoped, tag = 'output window, operand 4']
    #allocation10 [shape = 'u8[1024]{0}', space=vmem, size = 0x400, scoped, tag = 'output window, operand 5']
    #allocation11 [shape = 's32[2]{0}', space=sflag, size = 0x8, scoped, tag = 'scoped memory for tpu_custom_call.1']
    %14 = vsyncpa [#allocation3], 0
    %s15 = scalar_lea.sflag [#allocation3], 1
    %16 = vsyncpa %s15, 0
    %17 = vsyncpa [#allocation5], 0
    %s18 = scalar_lea.sflag [#allocation5], 1
    %19 = vsyncpa %s18, 0
    %20 = vsyncpa [#allocation8], 0
    %s21 = scalar_lea.sflag [#allocation8], 1
    %22 = vsyncpa %s21, 0
    %23 = vsyncpa [#allocation11], 0
    %s24 = scalar_lea.sflag [#allocation11], 1
    %25 = vsyncpa %s24, 0
    loop: start=0, step=1, limit=4
    $region2: #{tpu_custom_call.1} parent=1 // loop_pre_header
      _
    $region3: #{tpu_custom_call.1} parent=1 // loop_header
      %s27 = sphi 0, %s31
      %p28 = scmp.ge.s32.totalorder %s27, 4
      %s37 = sphi 0, %s39
      %s40 = sphi 0, %s37
      %s41 = sphi 0, %s40
      %s57 = sphi 0, %s41
      %s61 = sphi 0, %s61
      %s63 = sphi 0, %s61
      %s64 = sphi 0, %s63
      %s78 = sphi 0, %s64
      %s82 = sphi 0, %s82
      %s84 = sphi 0, %s82
      %s85 = sphi 0, %s84
      %s99 = sphi 0, %s85
      %s105 = sphi 0, %s107
      %s108 = sphi 0, %s105
      %s109 = sphi 0, %s108
      %s125 = sphi 0, %s109
      %s131 = sphi 0, %s133
      %s134 = sphi 0, %s131
      %s135 = sphi 0, %s134
      %s151 = sphi 0, %s135
      %s157 = sphi 0, %s159
      %s160 = sphi 0, %s157
      %s161 = sphi 0, %s160
      %s177 = sphi 0, %s161
      %s183 = sphi 0, %s185
      %s186 = sphi 0, %s183
      %s187 = sphi 0, %s186
      %s203 = sphi 0, %s187
      %s209 = sphi 0, %s211
      %s212 = sphi 0, %s209
      %s213 = sphi 0, %s212
      %s229 = sphi 0, %s213
      %s235 = sphi 0, %s237
      %s238 = sphi 0, %s235
      %s239 = sphi 0, %s238
      %s255 = sphi 0, %s239
    $region4: #{tpu_custom_call.1} parent=1 // loop_header_branch
      %30 = sbr.rel (%p28) target = $region8
    $region5: #{tpu_custom_call.1} parent=1 // loop_body
      %s32 = ssub.s32 %s27, 1
      %s33 = ssub.s32 %s27, 2
      %s34 = sadd.s32 %s27, 1
      %s35 = ssub.s32 %s27, %s34
      %p36 = scmp.eq.s32.totalorder %s35, 0
      %s38 = sadd.s32 %s37, 1
      %s39 = scalar_select %p36, %s37, %s38
      %p42 = pneg %p36
      %p43 = scmp.eq.s32.totalorder %s27, 1
      %p44 = por %p42, %p43
      %p45 = scmp.ne.s32.totalorder %s37, %s40
      %p46 = scmp.eq.s32.totalorder %s27, 0
      %p47 = por %p45, %p46
      %p48 = scmp.ne.s32.totalorder %s37, %s40
      %p49 = scmp.eq.s32.totalorder %s32, 1
      %p50 = por %p48, %p49
      %p51 = scmp.ne.s32.totalorder %s40, %s41
      %p52 = scmp.eq.s32.totalorder %s32, 0
      %p53 = por %p51, %p52
      %p54 = scmp.ne.s32.totalorder %s40, %s41
      %p55 = scmp.eq.s32.totalorder %s33, 1
      %p56 = por %p54, %p55
      %p58 = scmp.ne.s32.totalorder %s41, %s57
      %p59 = scmp.eq.s32.totalorder %s33, 0
      %p60 = por %p58, %p59
      %s62 = sadd.s32 %s61, 1
      %p65 = scmp.eq.s32.totalorder %s27, 1
      %p66 = scmp.ne.s32.totalorder %s61, %s63
      %p67 = scmp.eq.s32.totalorder %s27, 0
      %p68 = por %p66, %p67
      %p69 = scmp.ne.s32.totalorder %s61, %s63
      %p70 = scmp.eq.s32.totalorder %s32, 1
      %p71 = por %p69, %p70
      %p72 = scmp.ne.s32.totalorder %s63, %s64
      %p73 = scmp.eq.s32.totalorder %s32, 0
      %p74 = por %p72, %p73
      %p75 = scmp.ne.s32.totalorder %s63, %s64
      %p76 = scmp.eq.s32.totalorder %s33, 1
      %p77 = por %p75, %p76
      %p79 = scmp.ne.s32.totalorder %s64, %s78
      %p80 = scmp.eq.s32.totalorder %s33, 0
      %p81 = por %p79, %p80
      %s83 = sadd.s32 %s82, 1
      %p86 = scmp.eq.s32.totalorder %s27, 1
      %p87 = scmp.ne.s32.totalorder %s82, %s84
      %p88 = scmp.eq.s32.totalorder %s27, 0
      %p89 = por %p87, %p88
      %p90 = scmp.ne.s32.totalorder %s82, %s84
      %p91 = scmp.eq.s32.totalorder %s32, 1
      %p92 = por %p90, %p91
      %p93 = scmp.ne.s32.totalorder %s84, %s85
      %p94 = scmp.eq.s32.totalorder %s32, 0
      %p95 = por %p93, %p94
      %p96 = scmp.ne.s32.totalorder %s84, %s85
      %p97 = scmp.eq.s32.totalorder %s33, 1
      %p98 = por %p96, %p97
      %p100 = scmp.ne.s32.totalorder %s85, %s99
      %p101 = scmp.eq.s32.totalorder %s33, 0
      %p102 = por %p100, %p101
      %s103 = ssub.s32 %s27, %s34
      %p104 = scmp.eq.s32.totalorder %s103, 0
      %s106 = sadd.s32 %s105, 1
      %s107 = scalar_select %p104, %s105, %s106
      %p110 = pneg %p104
      %p111 = scmp.eq.s32.totalorder %s27, 1
      %p112 = por %p110, %p111
      %p113 = scmp.ne.s32.totalorder %s105, %s108
      %p114 = scmp.eq.s32.totalorder %s27, 0
      %p115 = por %p113, %p114
      %p116 = scmp.ne.s32.totalorder %s105, %s108
      %p117 = scmp.eq.s32.totalorder %s32, 1
      %p118 = por %p116, %p117
      %p119 = scmp.ne.s32.totalorder %s108, %s109
      %p120 = scmp.eq.s32.totalorder %s32, 0
      %p121 = por %p119, %p120
      %p122 = scmp.ne.s32.totalorder %s108, %s109
      %p123 = scmp.eq.s32.totalorder %s33, 1
      %p124 = por %p122, %p123
      %p126 = scmp.ne.s32.totalorder %s109, %s125
      %p127 = scmp.eq.s32.totalorder %s33, 0
      %p128 = por %p126, %p127
      %s129 = ssub.s32 %s27, %s34
      %p130 = scmp.eq.s32.totalorder %s129, 0
      %s132 = sadd.s32 %s131, 1
      %s133 = scalar_select %p130, %s131, %s132
      %p136 = pneg %p130
      %p137 = scmp.eq.s32.totalorder %s27, 1
      %p138 = por %p136, %p137
      %p139 = scmp.ne.s32.totalorder %s131, %s134
      %p140 = scmp.eq.s32.totalorder %s27, 0
      %p141 = por %p139, %p140
      %p142 = scmp.ne.s32.totalorder %s131, %s134
      %p143 = scmp.eq.s32.totalorder %s32, 1
      %p144 = por %p142, %p143
      %p145 = scmp.ne.s32.totalorder %s134, %s135
      %p146 = scmp.eq.s32.totalorder %s32, 0
      %p147 = por %p145, %p146
      %p148 = scmp.ne.s32.totalorder %s134, %s135
      %p149 = scmp.eq.s32.totalorder %s33, 1
      %p150 = por %p148, %p149
      %p152 = scmp.ne.s32.totalorder %s135, %s151
      %p153 = scmp.eq.s32.totalorder %s33, 0
      %p154 = por %p152, %p153
      %s155 = ssub.s32 %s27, %s34
      %p156 = scmp.eq.s32.totalorder %s155, 0
      %s158 = sadd.s32 %s157, 1
      %s159 = scalar_select %p156, %s157, %s158
      %p162 = pneg %p156
      %p163 = scmp.eq.s32.totalorder %s27, 1
      %p164 = por %p162, %p163
      %p165 = scmp.ne.s32.totalorder %s157, %s160
      %p166 = scmp.eq.s32.totalorder %s27, 0
      %p167 = por %p165, %p166
      %p168 = scmp.ne.s32.totalorder %s157, %s160
      %p169 = scmp.eq.s32.totalorder %s32, 1
      %p170 = por %p168, %p169
      %p171 = scmp.ne.s32.totalorder %s160, %s161
      %p172 = scmp.eq.s32.totalorder %s32, 0
      %p173 = por %p171, %p172
      %p174 = scmp.ne.s32.totalorder %s160, %s161
      %p175 = scmp.eq.s32.totalorder %s33, 1
      %p176 = por %p174, %p175
      %p178 = scmp.ne.s32.totalorder %s161, %s177
      %p179 = scmp.eq.s32.totalorder %s33, 0
      %p180 = por %p178, %p179
      %s181 = ssub.s32 %s27, %s34
      %p182 = scmp.eq.s32.totalorder %s181, 0
      %s184 = sadd.s32 %s183, 1
      %s185 = scalar_select %p182, %s183, %s184
      %p188 = pneg %p182
      %p189 = scmp.eq.s32.totalorder %s27, 1
      %p190 = por %p188, %p189
      %p191 = scmp.ne.s32.totalorder %s183, %s186
      %p192 = scmp.eq.s32.totalorder %s27, 0
      %p193 = por %p191, %p192
      %p194 = scmp.ne.s32.totalorder %s183, %s186
      %p195 = scmp.eq.s32.totalorder %s32, 1
      %p196 = por %p194, %p195
      %p197 = scmp.ne.s32.totalorder %s186, %s187
      %p198 = scmp.eq.s32.totalorder %s32, 0
      %p199 = por %p197, %p198
      %p200 = scmp.ne.s32.totalorder %s186, %s187
      %p201 = scmp.eq.s32.totalorder %s33, 1
      %p202 = por %p200, %p201
      %p204 = scmp.ne.s32.totalorder %s187, %s203
      %p205 = scmp.eq.s32.totalorder %s33, 0
      %p206 = por %p204, %p205
      %s207 = ssub.s32 %s27, %s34
      %p208 = scmp.eq.s32.totalorder %s207, 0
      %s210 = sadd.s32 %s209, 1
      %s211 = scalar_select %p208, %s209, %s210
      %p214 = pneg %p208
      %p215 = scmp.eq.s32.totalorder %s27, 1
      %p216 = por %p214, %p215
      %p217 = scmp.ne.s32.totalorder %s209, %s212
      %p218 = scmp.eq.s32.totalorder %s27, 0
      %p219 = por %p217, %p218
      %p220 = scmp.ne.s32.totalorder %s209, %s212
      %p221 = scmp.eq.s32.totalorder %s32, 1
      %p222 = por %p220, %p221
      %p223 = scmp.ne.s32.totalorder %s212, %s213
      %p224 = scmp.eq.s32.totalorder %s32, 0
      %p225 = por %p223, %p224
      %p226 = scmp.ne.s32.totalorder %s212, %s213
      %p227 = scmp.eq.s32.totalorder %s33, 1
      %p228 = por %p226, %p227
      %p230 = scmp.ne.s32.totalorder %s213, %s229
      %p231 = scmp.eq.s32.totalorder %s33, 0
      %p232 = por %p230, %p231
      %s233 = ssub.s32 %s27, %s34
      %p234 = scmp.eq.s32.totalorder %s233, 0
      %s236 = sadd.s32 %s235, 1
      %s237 = scalar_select %p234, %s235, %s236
      %p240 = pneg %p234
      %p241 = scmp.eq.s32.totalorder %s27, 1
      %p242 = por %p240, %p241
      %p243 = scmp.ne.s32.totalorder %s235, %s238
      %p244 = scmp.eq.s32.totalorder %s27, 0
      %p245 = por %p243, %p244
      %p246 = scmp.ne.s32.totalorder %s235, %s238
      %p247 = scmp.eq.s32.totalorder %s32, 1
      %p248 = por %p246, %p247
      %p249 = scmp.ne.s32.totalorder %s238, %s239
      %p250 = scmp.eq.s32.totalorder %s32, 0
      %p251 = por %p249, %p250
      %p252 = scmp.ne.s32.totalorder %s238, %s239
      %p253 = scmp.eq.s32.totalorder %s33, 1
      %p254 = por %p252, %p253
      %p256 = scmp.ne.s32.totalorder %s239, %s255
      %p257 = scmp.eq.s32.totalorder %s33, 0
      %p258 = por %p256, %p257
      %p259 = scmp.le.s32.totalorder 1, %s27
      %p260 = scmp.lt.s32.totalorder %s27, 3
      %p261 = pnand %p259, %p260
      %p262 = pneg %p261
      // Predicated region
      $region9: #{tpu_custom_call.1} parent=5 // pred_check
        _
      $region10: #{tpu_custom_call.1} parent=5 // pred_check_branch
        %264 = sbr.rel (%p261) target = $region12
      $region11: #{tpu_custom_call.1} parent=5 // pred_region
        %s265 = ssub.s32 %s27, 1
        // Predicated region
        $region13: #{tpu_custom_call.1} parent=11 // pred_check
          %p266 = pneg %p74
        $region14: #{tpu_custom_call.1} parent=11 // pred_check_branch
          %268 = sbr.rel (%p266) target = $region16
        $region15: #{tpu_custom_call.1} parent=11 // pred_region
          _
        $region16: #{tpu_custom_call.1} parent=11 // pred_fallthru
          _
        // Predicated region
        $region17: #{tpu_custom_call.1} parent=11 // pred_check
          %p269 = pneg %p95
        $region18: #{tpu_custom_call.1} parent=11 // pred_check_branch
          %271 = sbr.rel (%p269) target = $region20
        $region19: #{tpu_custom_call.1} parent=11 // pred_region
          _
        $region20: #{tpu_custom_call.1} parent=11 // pred_fallthru
          _
      $region12: #{tpu_custom_call.1} parent=5 // pred_fallthru
        _
      %p272 = scmp.lt.s32.totalorder %s27, 2
      // Predicated region
      $region21: #{tpu_custom_call.1} parent=5 // pred_check
        %p273 = pneg %p272
      $region22: #{tpu_custom_call.1} parent=5 // pred_check_branch
        %275 = sbr.rel (%p273) target = $region24
      $region23: #{tpu_custom_call.1} parent=5 // pred_region
        // Predicated region
        $region25: #{tpu_custom_call.1} parent=23 // pred_check
          %p276 = pneg %p47
        $region26: #{tpu_custom_call.1} parent=23 // pred_check_branch
          %278 = sbr.rel (%p276) target = $region28
        $region27: #{tpu_custom_call.1} parent=23 // pred_region
          %s279 = smul.u32 4, %s27
          %p280 = scmp.lt.s32.totalorder %s279, 7
          %s281 = scalar_select %p280, %s279, 7
          %s282 = smul.addr %s281, 18
          %s283 = smul.addr %s282, 4
          %s284 = scalar_lea.vmem %s0, %s283
          %s285 = smul.u32 4, %s27
        $region28: #{tpu_custom_call.1} parent=23 // pred_fallthru
          _
      $region24: #{tpu_custom_call.1} parent=5 // pred_fallthru
        _
      %p286 = scmp.le.s32.totalorder 1, %s27
      %p287 = scmp.lt.s32.totalorder %s27, 3
      %p288 = pnand %p286, %p287
      %p289 = pneg %p288
      // Predicated region
      $region29: #{tpu_custom_call.1} parent=5 // pred_check
        _
      $region30: #{tpu_custom_call.1} parent=5 // pred_check_branch
        %291 = sbr.rel (%p288) target = $region32
      $region31: #{tpu_custom_call.1} parent=5 // pred_region
        %s292 = ssub.s32 %s27, 1
        %s293 = smul.u32 4, %s32
        %p294 = scmp.lt.s32.totalorder %s293, 7
        %s295 = scalar_select %p294, %s293, 7
        %s296 = smul.addr %s295, 18
        %s297 = smul.addr %s296, 4
        %s298 = scalar_lea.vmem %s0, %s297
        %p299 = pneg %p53
        %p300 = pneg %p50
        %p301 = pneg %p74
        %p302 = pneg %p71
        %p303 = pneg %p95
        %p304 = pneg %p92
        %p305 = pneg %p121
        %p306 = pneg %p118
        %s307 = sand.u32 %s108, 1
        %s308 = scalar_lea.sflag [#allocation3], %s307
        %s309 = sand.u32 %s108, 1
        %s310 = smul.addr %s309, 32
        %s311 = scalar_lea.vmem [#allocation2], %s310
        %p312 = pneg %p147
        %p313 = pneg %p144
        %s314 = sand.u32 %s32, 1
        %s315 = scalar_lea.sflag [#allocation5], %s314
        %s316 = sand.u32 %s134, 1
        %s317 = scalar_lea.vmem [#allocation4], %s316
        %p318 = pneg %p173
        %p319 = pneg %p170
        %s320 = sand.u32 %s32, 1
        %s321 = scalar_lea.sflag [#allocation5], %s320
        %s322 = sand.u32 %s160, 1
        %s323 = scalar_lea.vmem [#allocation6], %s322
        %p324 = pneg %p199
        %p325 = pneg %p196
        %s326 = sand.u32 %s32, 1
        %s327 = scalar_lea.sflag [#allocation8], %s326
        %s328 = sand.u32 %s186, 1
        %s329 = smul.addr %s328, 32
        %s330 = scalar_lea.vmem [#allocation7], %s329
        %p331 = pneg %p225
        %p332 = pneg %p222
        %s333 = sand.u32 %s32, 1
        %s334 = scalar_lea.sflag [#allocation8], %s333
        %s335 = sand.u32 %s212, 1
        %s336 = scalar_lea.vmem [#allocation9], %s335
        %p337 = pneg %p251
        %p338 = pneg %p248
        %s339 = sand.u32 %s238, 1
        %s340 = scalar_lea.sflag [#allocation11], %s339
        %s341 = sand.u32 %s238, 1
        %s342 = scalar_lea.vmem [#allocation10], %s341
        %s343 = smul.u32 4, %s32
        %p344 = scmp.lt.s32.totalorder %s343, 7
        %s345 = scalar_select %p344, %s343, 7
        %s346 = smul.addr %s345, 18
        %s347 = smul.addr %s346, 4
        %s348 = scalar_lea.vmem %s0, %s347
        %s349 = smul.u32 4, %s32
        %v351 = vld [vmem:[%s348] sm:$0xf]
        %v352 = vld [vmem:[%s348 + $0x8] sm:$0xf]
        %v353 = vld [vmem:[%s348 + $0x10] sm:$0xf]
        %v354 = vld [vmem:[%s348 + $0x18] sm:$0xf]
        %v355 = vld [vmem:[%s348 + $0x20] sm:$0xf]
        %v356 = vld [vmem:[%s348 + $0x28] sm:$0xf]
        %v357 = vld [vmem:[%s348 + $0x30] sm:$0xf]
        %v358 = vld [vmem:[%s348 + $0x38] sm:$0xf]
        %v359 = vld [vmem:[%s1] sm:$0xf]
        %v360 = vld [vmem:[%s1 + $0x4] sm:$0xf]
        %v361 = vld [vmem:[%s1 + $0x8] sm:$0xf]
        %v362 = vld [vmem:[%s1 + $0xc] sm:$0xf]
        %v363 = vld [vmem:[%s1 + $0x10] sm:$0xf]
        %v364 = vld [vmem:[%s1 + $0x14] sm:$0xf]
        %v365 = vld [vmem:[%s1 + $0x18] sm:$0xf]
        %v366 = vld [vmem:[%s1 + $0x1c] sm:$0xf]
        %v367 = vld [vmem:[%s1 + $0x20] sm:$0xf]
        %v368 = vld [vmem:[%s1 + $0x24] sm:$0xf]
        %v369 = vld [vmem:[%s1 + $0x28] sm:$0xf]
        %v370 = vld [vmem:[%s1 + $0x2c] sm:$0xf]
        %v371 = vld [vmem:[%s1 + $0x30] sm:$0xf]
        %v372 = vld [vmem:[%s1 + $0x34] sm:$0xf]
        %v373 = vld [vmem:[%s1 + $0x38] sm:$0xf]
        %v374 = vld [vmem:[%s1 + $0x3c] sm:$0xf]
        %s375 = scalar_lea.vmem %s348, 72
        %v376 = vld [vmem:[%s375] sm:$0xf]
        %v377 = vld [vmem:[%s375 + $0x8] sm:$0xf]
        %v378 = vld [vmem:[%s375 + $0x10] sm:$0xf]
        %v379 = vld [vmem:[%s375 + $0x18] sm:$0xf]
        %v380 = vld [vmem:[%s375 + $0x20] sm:$0xf]
        %v381 = vld [vmem:[%s375 + $0x28] sm:$0xf]
        %v382 = vld [vmem:[%s375 + $0x30] sm:$0xf]
        %v383 = vld [vmem:[%s375 + $0x38] sm:$0xf]
        %s384 = scalar_lea.vmem %s1, 64
        %v385 = vld [vmem:[%s384] sm:$0xf]
        %v386 = vld [vmem:[%s384 + $0x4] sm:$0xf]
        %v387 = vld [vmem:[%s384 + $0x8] sm:$0xf]
        %v388 = vld [vmem:[%s384 + $0xc] sm:$0xf]
        %v389 = vld [vmem:[%s384 + $0x10] sm:$0xf]
        %v390 = vld [vmem:[%s384 + $0x14] sm:$0xf]
        %v391 = vld [vmem:[%s384 + $0x18] sm:$0xf]
        %v392 = vld [vmem:[%s384 + $0x1c] sm:$0xf]
        %v393 = vld [vmem:[%s384 + $0x20] sm:$0xf]
        %v394 = vld [vmem:[%s384 + $0x24] sm:$0xf]
        %v395 = vld [vmem:[%s384 + $0x28] sm:$0xf]
        %v396 = vld [vmem:[%s384 + $0x2c] sm:$0xf]
        %v397 = vld [vmem:[%s384 + $0x30] sm:$0xf]
        %v398 = vld [vmem:[%s384 + $0x34] sm:$0xf]
        %v399 = vld [vmem:[%s384 + $0x38] sm:$0xf]
        %v400 = vld [vmem:[%s384 + $0x3c] sm:$0xf]
        %v409 = vunpack.c.l.b16 %v376
        %v410 = vunpack.c.l.b16 %v377
        %v411 = vunpack.c.l.b16 %v378
        %v412 = vunpack.c.l.b16 %v379
        %v413 = vunpack.c.l.b16 %v380
        %v414 = vunpack.c.l.b16 %v381
        %v415 = vunpack.c.l.b16 %v382
        %v416 = vunpack.c.l.b16 %v383
        %v417 = vpack.c.b16 %v410, %v409
        %v418 = vpack.c.b16 %v412, %v411
        %v419 = vpack.c.b16 %v414, %v413
        %v420 = vpack.c.b16 %v416, %v415
        %v441 = vunpack.c.l.b16 %v385
        %v442 = vunpack.c.l.b16 %v386
        %v443 = vunpack.c.l.b16 %v387
        %v444 = vunpack.c.l.b16 %v388
        %v445 = vunpack.c.l.b16 %v389
        %v446 = vunpack.c.l.b16 %v390
        %v447 = vunpack.c.l.b16 %v391
        %v448 = vunpack.c.l.b16 %v392
        %v449 = vunpack.c.l.b16 %v393
        %v450 = vunpack.c.l.b16 %v394
        %v451 = vunpack.c.l.b16 %v395
        %v452 = vunpack.c.l.b16 %v396
        %v453 = vunpack.c.l.b16 %v397
        %v454 = vunpack.c.l.b16 %v398
        %v455 = vunpack.c.l.b16 %v399
        %v456 = vunpack.c.l.b16 %v400
        %v457 = vpack.c.b16 %v442, %v441
        %v458 = vpack.c.b16 %v444, %v443
        %v459 = vpack.c.b16 %v446, %v445
        %v460 = vpack.c.b16 %v448, %v447
        %v461 = vpack.c.b16 %v450, %v449
        %v462 = vpack.c.b16 %v452, %v451
        %v463 = vpack.c.b16 %v454, %v453
        %v464 = vpack.c.b16 %v456, %v455
        %473 = vmatprep.subr.bf16.mxu0 0
        %474 = vmatpush1.bf16.msra.mxu0 %v464
        %475 = vmatprep.subr.bf16.mxu0 0
        %476 = vmatpush1.bf16.msra.mxu0 %v463
        %477 = vmatprep.subr.bf16.mxu0 0
        %478 = vmatpush1.bf16.msra.mxu0 %v462
        %479 = vmatprep.subr.bf16.mxu0 0
        %480 = vmatpush1.bf16.msra.mxu0 %v461
        %481 = vmatprep.subr.bf16.mxu0 0
        %482 = vmatpush1.bf16.msra.mxu0 %v460
        %483 = vmatprep.subr.bf16.mxu0 0
        %484 = vmatpush1.bf16.msra.mxu0 %v459
        %485 = vmatprep.subr.bf16.mxu0 0
        %486 = vmatpush1.bf16.msra.mxu0 %v458
        %487 = vmatprep.subr.bf16.mxu0 0
        %488 = vmatpush1.bf16.msra.mxu0 %v457
        %489 = vmatprep.subr.bf16.mxu0 0
        %490 = vmatpush2.bf16.msra.mxu0 0
        %491 = vmatprep.subr.bf16.mxu0 0
        %492 = vmatpush2.bf16.msra.mxu0 0
        %493 = vmatprep.subr.bf16.mxu0 0
        %494 = vmatpush2.bf16.msra.mxu0 0
        %495 = vmatprep.subr.bf16.mxu0 0
        %496 = vmatpush2.bf16.msra.mxu0 0
        %497 = vmatprep.subr.bf16.mxu0 0
        %498 = vmatpush2.bf16.msra.mxu0 0
        %499 = vmatprep.subr.bf16.mxu0 0
        %500 = vmatpush2.bf16.msra.mxu0 0
        %501 = vmatprep.subr.bf16.mxu0 0
        %502 = vmatpush2.bf16.msra.mxu0 0
        %503 = vmatprep.subr.bf16.mxu0 0
        %504 = vmatpush2.bf16.msra.mxu0 0
        %505 = vmatprep.mubr.bf16.mxu0 0
        %506 = vmatmul.mubr.bf16.gmra.mxu0 %v417
        %v507 = vpop.f32.mrf.mxu0
        %v508 = vadd.f32 0.0, %v507
        %v509 = vpop.f32.mrf.mxu0
        %v510 = vpop.f32.mrf.mxu0
        %v511 = vadd.f32 0.0, %v510
        %v512 = vpop.f32.mrf.mxu0
        %513 = vmatprep.mubr.bf16.mxu0 0
        %514 = vmatmul.mubr.bf16.gmra.mxu0 %v418
        %v515 = vpop.f32.mrf.mxu0
        %v516 = vadd.f32 0.0, %v515
        %v517 = vpop.f32.mrf.mxu0
        %v518 = vpop.f32.mrf.mxu0
        %v519 = vadd.f32 0.0, %v518
        %v520 = vpop.f32.mrf.mxu0
        %521 = vmatprep.mubr.bf16.mxu0 0
        %522 = vmatmul.mubr.bf16.gmra.mxu0 %v419
        %v523 = vpop.f32.mrf.mxu0
        %v524 = vadd.f32 0.0, %v523
        %v525 = vpop.f32.mrf.mxu0
        %v526 = vpop.f32.mrf.mxu0
        %v527 = vadd.f32 0.0, %v526
        %v528 = vpop.f32.mrf.mxu0
        %529 = vmatprep.mubr.bf16.mxu0 0
        %530 = vmatmul.mubr.bf16.gmra.mxu0 %v420
        %v531 = vpop.f32.mrf.mxu0
        %v532 = vadd.f32 0.0, %v531
        %v533 = vpop.f32.mrf.mxu0
        %v534 = vpop.f32.mrf.mxu0
        %v535 = vadd.f32 0.0, %v534
        %v536 = vpop.f32.mrf.mxu0
        %537 = vdwg.mxu0
        %v546 = vunpack.c.l.b16 %v351
        %v547 = vunpack.c.l.b16 %v352
        %v548 = vunpack.c.l.b16 %v353
        %v549 = vunpack.c.l.b16 %v354
        %v550 = vunpack.c.l.b16 %v355
        %v551 = vunpack.c.l.b16 %v356
        %v552 = vunpack.c.l.b16 %v357
        %v553 = vunpack.c.l.b16 %v358
        %v554 = vpack.c.b16 %v547, %v546
        %v555 = vpack.c.b16 %v549, %v548
        %v556 = vpack.c.b16 %v551, %v550
        %v557 = vpack.c.b16 %v553, %v552
        %v578 = vunpack.c.l.b16 %v359
        %v579 = vunpack.c.l.b16 %v360
        %v580 = vunpack.c.l.b16 %v361
        %v581 = vunpack.c.l.b16 %v362
        %v582 = vunpack.c.l.b16 %v363
        %v583 = vunpack.c.l.b16 %v364
        %v584 = vunpack.c.l.b16 %v365
        %v585 = vunpack.c.l.b16 %v366
        %v586 = vunpack.c.l.b16 %v367
        %v587 = vunpack.c.l.b16 %v368
        %v588 = vunpack.c.l.b16 %v369
        %v589 = vunpack.c.l.b16 %v370
        %v590 = vunpack.c.l.b16 %v371
        %v591 = vunpack.c.l.b16 %v372
        %v592 = vunpack.c.l.b16 %v373
        %v593 = vunpack.c.l.b16 %v374
        %v594 = vpack.c.b16 %v579, %v578
        %v595 = vpack.c.b16 %v581, %v580
        %v596 = vpack.c.b16 %v583, %v582
        %v597 = vpack.c.b16 %v585, %v584
        %v598 = vpack.c.b16 %v587, %v586
        %v599 = vpack.c.b16 %v589, %v588
        %v600 = vpack.c.b16 %v591, %v590
        %v601 = vpack.c.b16 %v593, %v592
        %610 = vmatprep.subr.bf16.mxu0 0
        %611 = vmatpush1.bf16.msra.mxu0 %v601
        %612 = vmatprep.subr.bf16.mxu0 0
        %613 = vmatpush1.bf16.msra.mxu0 %v600
        %614 = vmatprep.subr.bf16.mxu0 0
        %615 = vmatpush1.bf16.msra.mxu0 %v599
        %616 = vmatprep.subr.bf16.mxu0 0
        %617 = vmatpush1.bf16.msra.mxu0 %v598
        %618 = vmatprep.subr.bf16.mxu0 0
        %619 = vmatpush1.bf16.msra.mxu0 %v597
        %620 = vmatprep.subr.bf16.mxu0 0
        %621 = vmatpush1.bf16.msra.mxu0 %v596
        %622 = vmatprep.subr.bf16.mxu0 0
        %623 = vmatpush1.bf16.msra.mxu0 %v595
        %624 = vmatprep.subr.bf16.mxu0 0
        %625 = vmatpush1.bf16.msra.mxu0 %v594
        %626 = vmatprep.subr.bf16.mxu0 0
        %627 = vmatpush2.bf16.msra.mxu0 0
        %628 = vmatprep.subr.bf16.mxu0 0
        %629 = vmatpush2.bf16.msra.mxu0 0
        %630 = vmatprep.subr.bf16.mxu0 0
        %631 = vmatpush2.bf16.msra.mxu0 0
        %632 = vmatprep.subr.bf16.mxu0 0
        %633 = vmatpush2.bf16.msra.mxu0 0
        %634 = vmatprep.subr.bf16.mxu0 0
        %635 = vmatpush2.bf16.msra.mxu0 0
        %636 = vmatprep.subr.bf16.mxu0 0
        %637 = vmatpush2.bf16.msra.mxu0 0
        %638 = vmatprep.subr.bf16.mxu0 0
        %639 = vmatpush2.bf16.msra.mxu0 0
        %640 = vmatprep.subr.bf16.mxu0 0
        %641 = vmatpush2.bf16.msra.mxu0 0
        %642 = vmatprep.mubr.bf16.mxu0 0
        %643 = vmatmul.mubr.bf16.gmra.mxu0 %v554
        %v644 = vpop.f32.mrf.mxu0
        %v645 = vadd.f32 %v508, %v644
        %v646 = vpop.f32.mrf.mxu0
        %v647 = vpop.f32.mrf.mxu0
        %v648 = vadd.f32 %v511, %v647
        %v649 = vpop.f32.mrf.mxu0
        %650 = vmatprep.mubr.bf16.mxu0 0
        %651 = vmatmul.mubr.bf16.gmra.mxu0 %v555
        %v652 = vpop.f32.mrf.mxu0
        %v653 = vadd.f32 %v516, %v652
        %v654 = vpop.f32.mrf.mxu0
        %v655 = vpop.f32.mrf.mxu0
        %v656 = vadd.f32 %v519, %v655
        %v657 = vpop.f32.mrf.mxu0
        %658 = vmatprep.mubr.bf16.mxu0 0
        %659 = vmatmul.mubr.bf16.gmra.mxu0 %v556
        %v660 = vpop.f32.mrf.mxu0
        %v661 = vadd.f32 %v524, %v660
        %v662 = vpop.f32.mrf.mxu0
        %v663 = vpop.f32.mrf.mxu0
        %v664 = vadd.f32 %v527, %v663
        %v665 = vpop.f32.mrf.mxu0
        %666 = vmatprep.mubr.bf16.mxu0 0
        %667 = vmatmul.mubr.bf16.gmra.mxu0 %v557
        %v668 = vpop.f32.mrf.mxu0
        %v669 = vadd.f32 %v532, %v668
        %v670 = vpop.f32.mrf.mxu0
        %v671 = vpop.f32.mrf.mxu0
        %v672 = vadd.f32 %v535, %v671
        %v673 = vpop.f32.mrf.mxu0
        %674 = vdwg.mxu0
        %v675 = vld [vmem:[%s348] sm:$0xf]
        %v676 = vld [vmem:[%s348 + $0x4] sm:$0x1]
        %v677 = vld [vmem:[%s348 + $0x8] sm:$0xf]
        %v678 = vld [vmem:[%s348 + $0xc] sm:$0x1]
        %v679 = vld [vmem:[%s348 + $0x10] sm:$0xf]
        %v680 = vld [vmem:[%s348 + $0x14] sm:$0x1]
        %v681 = vld [vmem:[%s348 + $0x18] sm:$0xf]
        %v682 = vld [vmem:[%s348 + $0x1c] sm:$0x1]
        %v683 = vld [vmem:[%s348 + $0x20] sm:$0xf]
        %v684 = vld [vmem:[%s348 + $0x24] sm:$0x1]
        %v685 = vld [vmem:[%s348 + $0x28] sm:$0xf]
        %v686 = vld [vmem:[%s348 + $0x2c] sm:$0x1]
        %v687 = vld [vmem:[%s348 + $0x30] sm:$0xf]
        %v688 = vld [vmem:[%s348 + $0x34] sm:$0x1]
        %v689 = vld [vmem:[%s348 + $0x38] sm:$0xf]
        %v690 = vld [vmem:[%s348 + $0x3c] sm:$0x1]
        %vm691 = vsmask.f32 3328
        %vm692 = vsmask.f32 7440
        %vm693 = vmor %vm691, %vm692
        %v695 = vshrl.u32 %v675, 16
        %v697 = vrot.slane %v695, 4
        %v698 = vshll.u32 %v675, 16
        %v700 = vrot.slane %v698, 5
        %v701 = vor.u32 %v697, %v700
        %v702 = vrot.slane %v701, 4
        %v704 = vshll.u32 %v676, 16
        %v706 = vrot.slane %v704, 5
        %v707 = vsel %vm693, %v702, %v706
        %v709 = vshrl.u32 %v677, 16
        %v711 = vrot.slane %v709, 4
        %v712 = vshll.u32 %v677, 16
        %v714 = vrot.slane %v712, 5
        %v715 = vor.u32 %v711, %v714
        %v716 = vrot.slane %v715, 4
        %v718 = vshll.u32 %v678, 16
        %v720 = vrot.slane %v718, 5
        %v721 = vsel %vm693, %v716, %v720
        %v723 = vshrl.u32 %v679, 16
        %v725 = vrot.slane %v723, 4
        %v726 = vshll.u32 %v679, 16
        %v728 = vrot.slane %v726, 5
        %v729 = vor.u32 %v725, %v728
        %v730 = vrot.slane %v729, 4
        %v732 = vshll.u32 %v680, 16
        %v734 = vrot.slane %v732, 5
        %v735 = vsel %vm693, %v730, %v734
        %v737 = vshrl.u32 %v681, 16
        %v739 = vrot.slane %v737, 4
        %v740 = vshll.u32 %v681, 16
        %v742 = vrot.slane %v740, 5
        %v743 = vor.u32 %v739, %v742
        %v744 = vrot.slane %v743, 4
        %v746 = vshll.u32 %v682, 16
        %v748 = vrot.slane %v746, 5
        %v749 = vsel %vm693, %v744, %v748
        %v751 = vshrl.u32 %v683, 16
        %v753 = vrot.slane %v751, 4
        %v754 = vshll.u32 %v683, 16
        %v756 = vrot.slane %v754, 5
        %v757 = vor.u32 %v753, %v756
        %v758 = vrot.slane %v757, 4
        %v760 = vshll.u32 %v684, 16
        %v762 = vrot.slane %v760, 5
        %v763 = vsel %vm693, %v758, %v762
        %v765 = vshrl.u32 %v685, 16
        %v767 = vrot.slane %v765, 4
        %v768 = vshll.u32 %v685, 16
        %v770 = vrot.slane %v768, 5
        %v771 = vor.u32 %v767, %v770
        %v772 = vrot.slane %v771, 4
        %v774 = vshll.u32 %v686, 16
        %v776 = vrot.slane %v774, 5
        %v777 = vsel %vm693, %v772, %v776
        %v779 = vshrl.u32 %v687, 16
        %v781 = vrot.slane %v779, 4
        %v782 = vshll.u32 %v687, 16
        %v784 = vrot.slane %v782, 5
        %v785 = vor.u32 %v781, %v784
        %v786 = vrot.slane %v785, 4
        %v788 = vshll.u32 %v688, 16
        %v790 = vrot.slane %v788, 5
        %v791 = vsel %vm693, %v786, %v790
        %v793 = vshrl.u32 %v689, 16
        %v795 = vrot.slane %v793, 4
        %v796 = vshll.u32 %v689, 16
        %v798 = vrot.slane %v796, 5
        %v799 = vor.u32 %v795, %v798
        %v800 = vrot.slane %v799, 4
        %v802 = vshll.u32 %v690, 16
        %v804 = vrot.slane %v802, 5
        %v805 = vsel %vm693, %v800, %v804
        %s806 = scalar_lea.vmem %s1, 128
        %v807 = vld [vmem:[%s806] sm:$0xf]
        %v808 = vld [vmem:[%s806 + $0x4] sm:$0xf]
        %v809 = vld [vmem:[%s806 + $0x8] sm:$0xf]
        %v810 = vld [vmem:[%s806 + $0xc] sm:$0xf]
        %v811 = vld [vmem:[%s806 + $0x10] sm:$0xf]
        %v812 = vld [vmem:[%s806 + $0x14] sm:$0xf]
        %v813 = vld [vmem:[%s806 + $0x18] sm:$0xf]
        %v814 = vld [vmem:[%s806 + $0x1c] sm:$0xf]
        %v815 = vld [vmem:[%s806 + $0x20] sm:$0xf]
        %v816 = vld [vmem:[%s806 + $0x24] sm:$0xf]
        %v817 = vld [vmem:[%s806 + $0x28] sm:$0xf]
        %v818 = vld [vmem:[%s806 + $0x2c] sm:$0xf]
        %v819 = vld [vmem:[%s806 + $0x30] sm:$0xf]
        %v820 = vld [vmem:[%s806 + $0x34] sm:$0xf]
        %v821 = vld [vmem:[%s806 + $0x38] sm:$0xf]
        %v822 = vld [vmem:[%s806 + $0x3c] sm:$0xf]
        %v823 = vunpack.c.l.b16 %v707
        %v824 = vunpack.c.l.b16 %v721
        %v825 = vunpack.c.l.b16 %v735
        %v826 = vunpack.c.l.b16 %v749
        %v827 = vunpack.c.l.b16 %v763
        %v828 = vunpack.c.l.b16 %v777
        %v829 = vunpack.c.l.b16 %v791
        %v830 = vunpack.c.l.b16 %v805
        %v831 = vpack.c.b16 %v824, %v823
        %v832 = vpack.c.b16 %v826, %v825
        %v833 = vpack.c.b16 %v828, %v827
        %v834 = vpack.c.b16 %v830, %v829
        %v855 = vunpack.c.l.b16 %v807
        %v856 = vunpack.c.l.b16 %v808
        %v857 = vunpack.c.l.b16 %v809
        %v858 = vunpack.c.l.b16 %v810
        %v859 = vunpack.c.l.b16 %v811
        %v860 = vunpack.c.l.b16 %v812
        %v861 = vunpack.c.l.b16 %v813
        %v862 = vunpack.c.l.b16 %v814
        %v863 = vunpack.c.l.b16 %v815
        %v864 = vunpack.c.l.b16 %v816
        %v865 = vunpack.c.l.b16 %v817
        %v866 = vunpack.c.l.b16 %v818
        %v867 = vunpack.c.l.b16 %v819
        %v868 = vunpack.c.l.b16 %v820
        %v869 = vunpack.c.l.b16 %v821
        %v870 = vunpack.c.l.b16 %v822
        %v871 = vpack.c.b16 %v856, %v855
        %v872 = vpack.c.b16 %v858, %v857
        %v873 = vpack.c.b16 %v860, %v859
        %v874 = vpack.c.b16 %v862, %v861
        %v875 = vpack.c.b16 %v864, %v863
        %v876 = vpack.c.b16 %v866, %v865
        %v877 = vpack.c.b16 %v868, %v867
        %v878 = vpack.c.b16 %v870, %v869
        %887 = vmatprep.subr.bf16.mxu0 0
        %888 = vmatpush1.bf16.msra.mxu0 %v878
        %889 = vmatprep.subr.bf16.mxu0 0
        %890 = vmatpush1.bf16.msra.mxu0 %v877
        %891 = vmatprep.subr.bf16.mxu0 0
        %892 = vmatpush1.bf16.msra.mxu0 %v876
        %893 = vmatprep.subr.bf16.mxu0 0
        %894 = vmatpush1.bf16.msra.mxu0 %v875
        %895 = vmatprep.subr.bf16.mxu0 0
        %896 = vmatpush1.bf16.msra.mxu0 %v874
        %897 = vmatprep.subr.bf16.mxu0 0
        %898 = vmatpush1.bf16.msra.mxu0 %v873
        %899 = vmatprep.subr.bf16.mxu0 0
        %900 = vmatpush1.bf16.msra.mxu0 %v872
        %901 = vmatprep.subr.bf16.mxu0 0
        %902 = vmatpush1.bf16.msra.mxu0 %v871
        %903 = vmatprep.subr.bf16.mxu0 0
        %904 = vmatpush2.bf16.msra.mxu0 0
        %905 = vmatprep.subr.bf16.mxu0 0
        %906 = vmatpush2.bf16.msra.mxu0 0
        %907 = vmatprep.subr.bf16.mxu0 0
        %908 = vmatpush2.bf16.msra.mxu0 0
        %909 = vmatprep.subr.bf16.mxu0 0
        %910 = vmatpush2.bf16.msra.mxu0 0
        %911 = vmatprep.subr.bf16.mxu0 0
        %912 = vmatpush2.bf16.msra.mxu0 0
        %913 = vmatprep.subr.bf16.mxu0 0
        %914 = vmatpush2.bf16.msra.mxu0 0
        %915 = vmatprep.subr.bf16.mxu0 0
        %916 = vmatpush2.bf16.msra.mxu0 0
        %917 = vmatprep.subr.bf16.mxu0 0
        %918 = vmatpush2.bf16.msra.mxu0 0
        %919 = vmatprep.mubr.bf16.mxu0 0
        %920 = vmatmul.mubr.bf16.gmra.mxu0 %v831
        %v921 = vpop.f32.mrf.mxu0
        %v922 = vadd.f32 0.0, %v921
        %v923 = vpop.f32.mrf.mxu0
        %v924 = vpop.f32.mrf.mxu0
        %v925 = vadd.f32 0.0, %v924
        %v926 = vpop.f32.mrf.mxu0
        %927 = vmatprep.mubr.bf16.mxu0 0
        %928 = vmatmul.mubr.bf16.gmra.mxu0 %v832
        %v929 = vpop.f32.mrf.mxu0
        %v930 = vadd.f32 0.0, %v929
        %v931 = vpop.f32.mrf.mxu0
        %v932 = vpop.f32.mrf.mxu0
        %v933 = vadd.f32 0.0, %v932
        %v934 = vpop.f32.mrf.mxu0
        %935 = vmatprep.mubr.bf16.mxu0 0
        %936 = vmatmul.mubr.bf16.gmra.mxu0 %v833
        %v937 = vpop.f32.mrf.mxu0
        %v938 = vadd.f32 0.0, %v937
        %v939 = vpop.f32.mrf.mxu0
        %v940 = vpop.f32.mrf.mxu0
        %v941 = vadd.f32 0.0, %v940
        %v942 = vpop.f32.mrf.mxu0
        %943 = vmatprep.mubr.bf16.mxu0 0
        %944 = vmatmul.mubr.bf16.gmra.mxu0 %v834
        %v945 = vpop.f32.mrf.mxu0
        %v946 = vadd.f32 0.0, %v945
        %v947 = vpop.f32.mrf.mxu0
        %v948 = vpop.f32.mrf.mxu0
        %v949 = vadd.f32 0.0, %v948
        %v950 = vpop.f32.mrf.mxu0
        %951 = vdwg.mxu0
        %v952 = vadd.f32 %v645, %v922
        %v953 = vadd.f32 %v648, %v925
        %v954 = vadd.f32 %v653, %v930
        %v955 = vadd.f32 %v656, %v933
        %v956 = vadd.f32 %v661, %v938
        %v957 = vadd.f32 %v664, %v941
        %v958 = vadd.f32 %v669, %v946
        %v959 = vadd.f32 %v672, %v949
        %s960 = scalar_lea.vmem %s348, 144
        %v961 = vld [vmem:[%s960] sm:$0xf]
        %v962 = vld [vmem:[%s960 + $0x8] sm:$0xf]
        %v963 = vld [vmem:[%s960 + $0x10] sm:$0xf]
        %v964 = vld [vmem:[%s960 + $0x18] sm:$0xf]
        %v965 = vld [vmem:[%s960 + $0x20] sm:$0xf]
        %v966 = vld [vmem:[%s960 + $0x28] sm:$0xf]
        %v967 = vld [vmem:[%s960 + $0x30] sm:$0xf]
        %v968 = vld [vmem:[%s960 + $0x38] sm:$0xf]
        %s969 = scalar_lea.vmem %s1, 192
        %v970 = vld [vmem:[%s969] sm:$0xf]
        %v971 = vld [vmem:[%s969 + $0x4] sm:$0xf]
        %v972 = vld [vmem:[%s969 + $0x8] sm:$0xf]
        %v973 = vld [vmem:[%s969 + $0xc] sm:$0xf]
        %v974 = vld [vmem:[%s969 + $0x10] sm:$0xf]
        %v975 = vld [vmem:[%s969 + $0x14] sm:$0xf]
        %v976 = vld [vmem:[%s969 + $0x18] sm:$0xf]
        %v977 = vld [vmem:[%s969 + $0x1c] sm:$0xf]
        %v978 = vld [vmem:[%s969 + $0x20] sm:$0xf]
        %v979 = vld [vmem:[%s969 + $0x24] sm:$0xf]
        %v980 = vld [vmem:[%s969 + $0x28] sm:$0xf]
        %v981 = vld [vmem:[%s969 + $0x2c] sm:$0xf]
        %v982 = vld [vmem:[%s969 + $0x30] sm:$0xf]
        %v983 = vld [vmem:[%s969 + $0x34] sm:$0xf]
        %v984 = vld [vmem:[%s969 + $0x38] sm:$0xf]
        %v985 = vld [vmem:[%s969 + $0x3c] sm:$0xf]
        %v994 = vunpack.c.l.b16 %v961
        %v995 = vunpack.c.l.b16 %v962
        %v996 = vunpack.c.l.b16 %v963
        %v997 = vunpack.c.l.b16 %v964
        %v998 = vunpack.c.l.b16 %v965
        %v999 = vunpack.c.l.b16 %v966
        %v1000 = vunpack.c.l.b16 %v967
        %v1001 = vunpack.c.l.b16 %v968
        %v1002 = vpack.c.b16 %v995, %v994
        %v1003 = vpack.c.b16 %v997, %v996
        %v1004 = vpack.c.b16 %v999, %v998
        %v1005 = vpack.c.b16 %v1001, %v1000
        %v1026 = vunpack.c.l.b16 %v970
        %v1027 = vunpack.c.l.b16 %v971
        %v1028 = vunpack.c.l.b16 %v972
        %v1029 = vunpack.c.l.b16 %v973
        %v1030 = vunpack.c.l.b16 %v974
        %v1031 = vunpack.c.l.b16 %v975
        %v1032 = vunpack.c.l.b16 %v976
        %v1033 = vunpack.c.l.b16 %v977
        %v1034 = vunpack.c.l.b16 %v978
        %v1035 = vunpack.c.l.b16 %v979
        %v1036 = vunpack.c.l.b16 %v980
        %v1037 = vunpack.c.l.b16 %v981
        %v1038 = vunpack.c.l.b16 %v982
        %v1039 = vunpack.c.l.b16 %v983
        %v1040 = vunpack.c.l.b16 %v984
        %v1041 = vunpack.c.l.b16 %v985
        %v1042 = vpack.c.b16 %v1027, %v1026
        %v1043 = vpack.c.b16 %v1029, %v1028
        %v1044 = vpack.c.b16 %v1031, %v1030
        %v1045 = vpack.c.b16 %v1033, %v1032
        %v1046 = vpack.c.b16 %v1035, %v1034
        %v1047 = vpack.c.b16 %v1037, %v1036
        %v1048 = vpack.c.b16 %v1039, %v1038
        %v1049 = vpack.c.b16 %v1041, %v1040
        %1058 = vmatprep.subr.bf16.mxu0 0
        %1059 = vmatpush1.bf16.msra.mxu0 %v1049
        %1060 = vmatprep.subr.bf16.mxu0 0
        %1061 = vmatpush1.bf16.msra.mxu0 %v1048
        %1062 = vmatprep.subr.bf16.mxu0 0
        %1063 = vmatpush1.bf16.msra.mxu0 %v1047
        %1064 = vmatprep.subr.bf16.mxu0 0
        %1065 = vmatpush1.bf16.msra.mxu0 %v1046
        %1066 = vmatprep.subr.bf16.mxu0 0
        %1067 = vmatpush1.bf16.msra.mxu0 %v1045
        %1068 = vmatprep.subr.bf16.mxu0 0
        %1069 = vmatpush1.bf16.msra.mxu0 %v1044
        %1070 = vmatprep.subr.bf16.mxu0 0
        %1071 = vmatpush1.bf16.msra.mxu0 %v1043
        %1072 = vmatprep.subr.bf16.mxu0 0
        %1073 = vmatpush1.bf16.msra.mxu0 %v1042
        %1074 = vmatprep.subr.bf16.mxu0 0
        %1075 = vmatpush2.bf16.msra.mxu0 0
        %1076 = vmatprep.subr.bf16.mxu0 0
        %1077 = vmatpush2.bf16.msra.mxu0 0
        %1078 = vmatprep.subr.bf16.mxu0 0
        %1079 = vmatpush2.bf16.msra.mxu0 0
        %1080 = vmatprep.subr.bf16.mxu0 0
        %1081 = vmatpush2.bf16.msra.mxu0 0
        %1082 = vmatprep.subr.bf16.mxu0 0
        %1083 = vmatpush2.bf16.msra.mxu0 0
        %1084 = vmatprep.subr.bf16.mxu0 0
        %1085 = vmatpush2.bf16.msra.mxu0 0
        %1086 = vmatprep.subr.bf16.mxu0 0
        %1087 = vmatpush2.bf16.msra.mxu0 0
        %1088 = vmatprep.subr.bf16.mxu0 0
        %1089 = vmatpush2.bf16.msra.mxu0 0
        %1090 = vmatprep.mubr.bf16.mxu0 0
        %1091 = vmatmul.mubr.bf16.gmra.mxu0 %v1002
        %v1092 = vpop.f32.mrf.mxu0
        %v1093 = vadd.f32 0.0, %v1092
        %v1094 = vpop.f32.mrf.mxu0
        %v1095 = vpop.f32.mrf.mxu0
        %v1096 = vadd.f32 0.0, %v1095
        %v1097 = vpop.f32.mrf.mxu0
        %1098 = vmatprep.mubr.bf16.mxu0 0
        %1099 = vmatmul.mubr.bf16.gmra.mxu0 %v1003
        %v1100 = vpop.f32.mrf.mxu0
        %v1101 = vadd.f32 0.0, %v1100
        %v1102 = vpop.f32.mrf.mxu0
        %v1103 = vpop.f32.mrf.mxu0
        %v1104 = vadd.f32 0.0, %v1103
        %v1105 = vpop.f32.mrf.mxu0
        %1106 = vmatprep.mubr.bf16.mxu0 0
        %1107 = vmatmul.mubr.bf16.gmra.mxu0 %v1004
        %v1108 = vpop.f32.mrf.mxu0
        %v1109 = vadd.f32 0.0, %v1108
        %v1110 = vpop.f32.mrf.mxu0
        %v1111 = vpop.f32.mrf.mxu0
        %v1112 = vadd.f32 0.0, %v1111
        %v1113 = vpop.f32.mrf.mxu0
        %1114 = vmatprep.mubr.bf16.mxu0 0
        %1115 = vmatmul.mubr.bf16.gmra.mxu0 %v1005
        %v1116 = vpop.f32.mrf.mxu0
        %v1117 = vadd.f32 0.0, %v1116
        %v1118 = vpop.f32.mrf.mxu0
        %v1119 = vpop.f32.mrf.mxu0
        %v1120 = vadd.f32 0.0, %v1119
        %v1121 = vpop.f32.mrf.mxu0
        %1122 = vdwg.mxu0
        %v1123 = vadd.f32 %v952, %v1093
        %v1124 = vadd.f32 %v953, %v1096
        %v1125 = vadd.f32 %v954, %v1101
        %v1126 = vadd.f32 %v955, %v1104
        %v1127 = vadd.f32 %v956, %v1109
        %v1128 = vadd.f32 %v957, %v1112
        %v1129 = vadd.f32 %v958, %v1117
        %v1130 = vadd.f32 %v959, %v1120
        %s1131 = scalar_lea.vmem %s348, 216
        %v1132 = vld [vmem:[%s1131] sm:$0xf]
        %v1133 = vld [vmem:[%s1131 + $0x8] sm:$0xf]
        %v1134 = vld [vmem:[%s1131 + $0x10] sm:$0xf]
        %v1135 = vld [vmem:[%s1131 + $0x18] sm:$0xf]
        %v1136 = vld [vmem:[%s1131 + $0x20] sm:$0xf]
        %v1137 = vld [vmem:[%s1131 + $0x28] sm:$0xf]
        %v1138 = vld [vmem:[%s1131 + $0x30] sm:$0xf]
        %v1139 = vld [vmem:[%s1131 + $0x38] sm:$0xf]
        %s1140 = scalar_lea.vmem %s1, 256
        %v1141 = vld [vmem:[%s1140] sm:$0xf]
        %v1142 = vld [vmem:[%s1140 + $0x4] sm:$0xf]
        %v1143 = vld [vmem:[%s1140 + $0x8] sm:$0xf]
        %v1144 = vld [vmem:[%s1140 + $0xc] sm:$0xf]
        %v1145 = vld [vmem:[%s1140 + $0x10] sm:$0xf]
        %v1146 = vld [vmem:[%s1140 + $0x14] sm:$0xf]
        %v1147 = vld [vmem:[%s1140 + $0x18] sm:$0xf]
        %v1148 = vld [vmem:[%s1140 + $0x1c] sm:$0xf]
        %v1149 = vld [vmem:[%s1140 + $0x20] sm:$0xf]
        %v1150 = vld [vmem:[%s1140 + $0x24] sm:$0xf]
        %v1151 = vld [vmem:[%s1140 + $0x28] sm:$0xf]
        %v1152 = vld [vmem:[%s1140 + $0x2c] sm:$0xf]
        %v1153 = vld [vmem:[%s1140 + $0x30] sm:$0xf]
        %v1154 = vld [vmem:[%s1140 + $0x34] sm:$0xf]
        %v1155 = vld [vmem:[%s1140 + $0x38] sm:$0xf]
        %v1156 = vld [vmem:[%s1140 + $0x3c] sm:$0xf]
        %v1165 = vunpack.c.l.b16 %v1132
        %v1166 = vunpack.c.l.b16 %v1133
        %v1167 = vunpack.c.l.b16 %v1134
        %v1168 = vunpack.c.l.b16 %v1135
        %v1169 = vunpack.c.l.b16 %v1136
        %v1170 = vunpack.c.l.b16 %v1137
        %v1171 = vunpack.c.l.b16 %v1138
        %v1172 = vunpack.c.l.b16 %v1139
        %v1173 = vpack.c.b16 %v1166, %v1165
        %v1174 = vpack.c.b16 %v1168, %v1167
        %v1175 = vpack.c.b16 %v1170, %v1169
        %v1176 = vpack.c.b16 %v1172, %v1171
        %v1197 = vunpack.c.l.b16 %v1141
        %v1198 = vunpack.c.l.b16 %v1142
        %v1199 = vunpack.c.l.b16 %v1143
        %v1200 = vunpack.c.l.b16 %v1144
        %v1201 = vunpack.c.l.b16 %v1145
        %v1202 = vunpack.c.l.b16 %v1146
        %v1203 = vunpack.c.l.b16 %v1147
        %v1204 = vunpack.c.l.b16 %v1148
        %v1205 = vunpack.c.l.b16 %v1149
        %v1206 = vunpack.c.l.b16 %v1150
        %v1207 = vunpack.c.l.b16 %v1151
        %v1208 = vunpack.c.l.b16 %v1152
        %v1209 = vunpack.c.l.b16 %v1153
        %v1210 = vunpack.c.l.b16 %v1154
        %v1211 = vunpack.c.l.b16 %v1155
        %v1212 = vunpack.c.l.b16 %v1156
        %v1213 = vpack.c.b16 %v1198, %v1197
        %v1214 = vpack.c.b16 %v1200, %v1199
        %v1215 = vpack.c.b16 %v1202, %v1201
        %v1216 = vpack.c.b16 %v1204, %v1203
        %v1217 = vpack.c.b16 %v1206, %v1205
        %v1218 = vpack.c.b16 %v1208, %v1207
        %v1219 = vpack.c.b16 %v1210, %v1209
        %v1220 = vpack.c.b16 %v1212, %v1211
        %1229 = vmatprep.subr.bf16.mxu0 0
        %1230 = vmatpush1.bf16.msra.mxu0 %v1220
        %1231 = vmatprep.subr.bf16.mxu0 0
        %1232 = vmatpush1.bf16.msra.mxu0 %v1219
        %1233 = vmatprep.subr.bf16.mxu0 0
        %1234 = vmatpush1.bf16.msra.mxu0 %v1218
        %1235 = vmatprep.subr.bf16.mxu0 0
        %1236 = vmatpush1.bf16.msra.mxu0 %v1217
        %1237 = vmatprep.subr.bf16.mxu0 0
        %1238 = vmatpush1.bf16.msra.mxu0 %v1216
        %1239 = vmatprep.subr.bf16.mxu0 0
        %1240 = vmatpush1.bf16.msra.mxu0 %v1215
        %1241 = vmatprep.subr.bf16.mxu0 0
        %1242 = vmatpush1.bf16.msra.mxu0 %v1214
        %1243 = vmatprep.subr.bf16.mxu0 0
        %1244 = vmatpush1.bf16.msra.mxu0 %v1213
        %1245 = vmatprep.subr.bf16.mxu0 0
        %1246 = vmatpush2.bf16.msra.mxu0 0
        %1247 = vmatprep.subr.bf16.mxu0 0
        %1248 = vmatpush2.bf16.msra.mxu0 0
        %1249 = vmatprep.subr.bf16.mxu0 0
        %1250 = vmatpush2.bf16.msra.mxu0 0
        %1251 = vmatprep.subr.bf16.mxu0 0
        %1252 = vmatpush2.bf16.msra.mxu0 0
        %1253 = vmatprep.subr.bf16.mxu0 0
        %1254 = vmatpush2.bf16.msra.mxu0 0
        %1255 = vmatprep.subr.bf16.mxu0 0
        %1256 = vmatpush2.bf16.msra.mxu0 0
        %1257 = vmatprep.subr.bf16.mxu0 0
        %1258 = vmatpush2.bf16.msra.mxu0 0
        %1259 = vmatprep.subr.bf16.mxu0 0
        %1260 = vmatpush2.bf16.msra.mxu0 0
        %1261 = vmatprep.mubr.bf16.mxu0 0
        %1262 = vmatmul.mubr.bf16.gmra.mxu0 %v1173
        %v1263 = vpop.f32.mrf.mxu0
        %v1264 = vadd.f32 0.0, %v1263
        %v1265 = vpop.f32.mrf.mxu0
        %v1266 = vpop.f32.mrf.mxu0
        %v1267 = vadd.f32 0.0, %v1266
        %v1268 = vpop.f32.mrf.mxu0
        %1269 = vmatprep.mubr.bf16.mxu0 0
        %1270 = vmatmul.mubr.bf16.gmra.mxu0 %v1174
        %v1271 = vpop.f32.mrf.mxu0
        %v1272 = vadd.f32 0.0, %v1271
        %v1273 = vpop.f32.mrf.mxu0
        %v1274 = vpop.f32.mrf.mxu0
        %v1275 = vadd.f32 0.0, %v1274
        %v1276 = vpop.f32.mrf.mxu0
        %1277 = vmatprep.mubr.bf16.mxu0 0
        %1278 = vmatmul.mubr.bf16.gmra.mxu0 %v1175
        %v1279 = vpop.f32.mrf.mxu0
        %v1280 = vadd.f32 0.0, %v1279
        %v1281 = vpop.f32.mrf.mxu0
        %v1282 = vpop.f32.mrf.mxu0
        %v1283 = vadd.f32 0.0, %v1282
        %v1284 = vpop.f32.mrf.mxu0
        %1285 = vmatprep.mubr.bf16.mxu0 0
        %1286 = vmatmul.mubr.bf16.gmra.mxu0 %v1176
        %v1287 = vpop.f32.mrf.mxu0
        %v1288 = vadd.f32 0.0, %v1287
        %v1289 = vpop.f32.mrf.mxu0
        %v1290 = vpop.f32.mrf.mxu0
        %v1291 = vadd.f32 0.0, %v1290
        %v1292 = vpop.f32.mrf.mxu0
        %1293 = vdwg.mxu0
        %v1294 = vadd.f32 %v1123, %v1264
        %v1295 = vadd.f32 %v1124, %v1267
        %v1296 = vadd.f32 %v1125, %v1272
        %v1297 = vadd.f32 %v1126, %v1275
        %v1298 = vadd.f32 %v1127, %v1280
        %v1299 = vadd.f32 %v1128, %v1283
        %v1300 = vadd.f32 %v1129, %v1288
        %v1301 = vadd.f32 %v1130, %v1291
        %v1302 = vld [vmem:[%s960] sm:$0xf]
        %v1303 = vld [vmem:[%s960 + $0x4] sm:$0x1]
        %v1304 = vld [vmem:[%s960 + $0x8] sm:$0xf]
        %v1305 = vld [vmem:[%s960 + $0xc] sm:$0x1]
        %v1306 = vld [vmem:[%s960 + $0x10] sm:$0xf]
        %v1307 = vld [vmem:[%s960 + $0x14] sm:$0x1]
        %v1308 = vld [vmem:[%s960 + $0x18] sm:$0xf]
        %v1309 = vld [vmem:[%s960 + $0x1c] sm:$0x1]
        %v1310 = vld [vmem:[%s960 + $0x20] sm:$0xf]
        %v1311 = vld [vmem:[%s960 + $0x24] sm:$0x1]
        %v1312 = vld [vmem:[%s960 + $0x28] sm:$0xf]
        %v1313 = vld [vmem:[%s960 + $0x2c] sm:$0x1]
        %v1314 = vld [vmem:[%s960 + $0x30] sm:$0xf]
        %v1315 = vld [vmem:[%s960 + $0x34] sm:$0x1]
        %v1316 = vld [vmem:[%s960 + $0x38] sm:$0xf]
        %v1317 = vld [vmem:[%s960 + $0x3c] sm:$0x1]
        %v1319 = vshrl.u32 %v1302, 16
        %v1321 = vrot.slane %v1319, 4
        %v1322 = vshll.u32 %v1302, 16
        %v1324 = vrot.slane %v1322, 5
        %v1325 = vor.u32 %v1321, %v1324
        %v1326 = vrot.slane %v1325, 4
        %v1328 = vshll.u32 %v1303, 16
        %v1330 = vrot.slane %v1328, 5
        %v1331 = vsel %vm693, %v1326, %v1330
        %v1333 = vshrl.u32 %v1304, 16
        %v1335 = vrot.slane %v1333, 4
        %v1336 = vshll.u32 %v1304, 16
        %v1338 = vrot.slane %v1336, 5
        %v1339 = vor.u32 %v1335, %v1338
        %v1340 = vrot.slane %v1339, 4
        %v1342 = vshll.u32 %v1305, 16
        %v1344 = vrot.slane %v1342, 5
        %v1345 = vsel %vm693, %v1340, %v1344
        %v1347 = vshrl.u32 %v1306, 16
        %v1349 = vrot.slane %v1347, 4
        %v1350 = vshll.u32 %v1306, 16
        %v1352 = vrot.slane %v1350, 5
        %v1353 = vor.u32 %v1349, %v1352
        %v1354 = vrot.slane %v1353, 4
        %v1356 = vshll.u32 %v1307, 16
        %v1358 = vrot.slane %v1356, 5
        %v1359 = vsel %vm693, %v1354, %v1358
        %v1361 = vshrl.u32 %v1308, 16
        %v1363 = vrot.slane %v1361, 4
        %v1364 = vshll.u32 %v1308, 16
        %v1366 = vrot.slane %v1364, 5
        %v1367 = vor.u32 %v1363, %v1366
        %v1368 = vrot.slane %v1367, 4
        %v1370 = vshll.u32 %v1309, 16
        %v1372 = vrot.slane %v1370, 5
        %v1373 = vsel %vm693, %v1368, %v1372
        %v1375 = vshrl.u32 %v1310, 16
        %v1377 = vrot.slane %v1375, 4
        %v1378 = vshll.u32 %v1310, 16
        %v1380 = vrot.slane %v1378, 5
        %v1381 = vor.u32 %v1377, %v1380
        %v1382 = vrot.slane %v1381, 4
        %v1384 = vshll.u32 %v1311, 16
        %v1386 = vrot.slane %v1384, 5
        %v1387 = vsel %vm693, %v1382, %v1386
        %v1389 = vshrl.u32 %v1312, 16
        %v1391 = vrot.slane %v1389, 4
        %v1392 = vshll.u32 %v1312, 16
        %v1394 = vrot.slane %v1392, 5
        %v1395 = vor.u32 %v1391, %v1394
        %v1396 = vrot.slane %v1395, 4
        %v1398 = vshll.u32 %v1313, 16
        %v1400 = vrot.slane %v1398, 5
        %v1401 = vsel %vm693, %v1396, %v1400
        %v1403 = vshrl.u32 %v1314, 16
        %v1405 = vrot.slane %v1403, 4
        %v1406 = vshll.u32 %v1314, 16
        %v1408 = vrot.slane %v1406, 5
        %v1409 = vor.u32 %v1405, %v1408
        %v1410 = vrot.slane %v1409, 4
        %v1412 = vshll.u32 %v1315, 16
        %v1414 = vrot.slane %v1412, 5
        %v1415 = vsel %vm693, %v1410, %v1414
        %v1417 = vshrl.u32 %v1316, 16
        %v1419 = vrot.slane %v1417, 4
        %v1420 = vshll.u32 %v1316, 16
        %v1422 = vrot.slane %v1420, 5
        %v1423 = vor.u32 %v1419, %v1422
        %v1424 = vrot.slane %v1423, 4
        %v1426 = vshll.u32 %v1317, 16
        %v1428 = vrot.slane %v1426, 5
        %v1429 = vsel %vm693, %v1424, %v1428
        %s1430 = scalar_lea.vmem %s1, 320
        %v1431 = vld [vmem:[%s1430] sm:$0xf]
        %v1432 = vld [vmem:[%s1430 + $0x4] sm:$0xf]
        %v1433 = vld [vmem:[%s1430 + $0x8] sm:$0xf]
        %v1434 = vld [vmem:[%s1430 + $0xc] sm:$0xf]
        %v1435 = vld [vmem:[%s1430 + $0x10] sm:$0xf]
        %v1436 = vld [vmem:[%s1430 + $0x14] sm:$0xf]
        %v1437 = vld [vmem:[%s1430 + $0x18] sm:$0xf]
        %v1438 = vld [vmem:[%s1430 + $0x1c] sm:$0xf]
        %v1439 = vld [vmem:[%s1430 + $0x20] sm:$0xf]
        %v1440 = vld [vmem:[%s1430 + $0x24] sm:$0xf]
        %v1441 = vld [vmem:[%s1430 + $0x28] sm:$0xf]
        %v1442 = vld [vmem:[%s1430 + $0x2c] sm:$0xf]
        %v1443 = vld [vmem:[%s1430 + $0x30] sm:$0xf]
        %v1444 = vld [vmem:[%s1430 + $0x34] sm:$0xf]
        %v1445 = vld [vmem:[%s1430 + $0x38] sm:$0xf]
        %v1446 = vld [vmem:[%s1430 + $0x3c] sm:$0xf]
        %v1447 = vunpack.c.l.b16 %v1331
        %v1448 = vunpack.c.l.b16 %v1345
        %v1449 = vunpack.c.l.b16 %v1359
        %v1450 = vunpack.c.l.b16 %v1373
        %v1451 = vunpack.c.l.b16 %v1387
        %v1452 = vunpack.c.l.b16 %v1401
        %v1453 = vunpack.c.l.b16 %v1415
        %v1454 = vunpack.c.l.b16 %v1429
        %v1455 = vpack.c.b16 %v1448, %v1447
        %v1456 = vpack.c.b16 %v1450, %v1449
        %v1457 = vpack.c.b16 %v1452, %v1451
        %v1458 = vpack.c.b16 %v1454, %v1453
        %v1479 = vunpack.c.l.b16 %v1431
        %v1480 = vunpack.c.l.b16 %v1432
        %v1481 = vunpack.c.l.b16 %v1433
        %v1482 = vunpack.c.l.b16 %v1434
        %v1483 = vunpack.c.l.b16 %v1435
        %v1484 = vunpack.c.l.b16 %v1436
        %v1485 = vunpack.c.l.b16 %v1437
        %v1486 = vunpack.c.l.b16 %v1438
        %v1487 = vunpack.c.l.b16 %v1439
        %v1488 = vunpack.c.l.b16 %v1440
        %v1489 = vunpack.c.l.b16 %v1441
        %v1490 = vunpack.c.l.b16 %v1442
        %v1491 = vunpack.c.l.b16 %v1443
        %v1492 = vunpack.c.l.b16 %v1444
        %v1493 = vunpack.c.l.b16 %v1445
        %v1494 = vunpack.c.l.b16 %v1446
        %v1495 = vpack.c.b16 %v1480, %v1479
        %v1496 = vpack.c.b16 %v1482, %v1481
        %v1497 = vpack.c.b16 %v1484, %v1483
        %v1498 = vpack.c.b16 %v1486, %v1485
        %v1499 = vpack.c.b16 %v1488, %v1487
        %v1500 = vpack.c.b16 %v1490, %v1489
        %v1501 = vpack.c.b16 %v1492, %v1491
        %v1502 = vpack.c.b16 %v1494, %v1493
        %1511 = vmatprep.subr.bf16.mxu0 0
        %1512 = vmatpush1.bf16.msra.mxu0 %v1502
        %1513 = vmatprep.subr.bf16.mxu0 0
        %1514 = vmatpush1.bf16.msra.mxu0 %v1501
        %1515 = vmatprep.subr.bf16.mxu0 0
        %1516 = vmatpush1.bf16.msra.mxu0 %v1500
        %1517 = vmatprep.subr.bf16.mxu0 0
        %1518 = vmatpush1.bf16.msra.mxu0 %v1499
        %1519 = vmatprep.subr.bf16.mxu0 0
        %1520 = vmatpush1.bf16.msra.mxu0 %v1498
        %1521 = vmatprep.subr.bf16.mxu0 0
        %1522 = vmatpush1.bf16.msra.mxu0 %v1497
        %1523 = vmatprep.subr.bf16.mxu0 0
        %1524 = vmatpush1.bf16.msra.mxu0 %v1496
        %1525 = vmatprep.subr.bf16.mxu0 0
        %1526 = vmatpush1.bf16.msra.mxu0 %v1495
        %1527 = vmatprep.subr.bf16.mxu0 0
        %1528 = vmatpush2.bf16.msra.mxu0 0
        %1529 = vmatprep.subr.bf16.mxu0 0
        %1530 = vmatpush2.bf16.msra.mxu0 0
        %1531 = vmatprep.subr.bf16.mxu0 0
        %1532 = vmatpush2.bf16.msra.mxu0 0
        %1533 = vmatprep.subr.bf16.mxu0 0
        %1534 = vmatpush2.bf16.msra.mxu0 0
        %1535 = vmatprep.subr.bf16.mxu0 0
        %1536 = vmatpush2.bf16.msra.mxu0 0
        %1537 = vmatprep.subr.bf16.mxu0 0
        %1538 = vmatpush2.bf16.msra.mxu0 0
        %1539 = vmatprep.subr.bf16.mxu0 0
        %1540 = vmatpush2.bf16.msra.mxu0 0
        %1541 = vmatprep.subr.bf16.mxu0 0
        %1542 = vmatpush2.bf16.msra.mxu0 0
        %1543 = vmatprep.mubr.bf16.mxu0 0
        %1544 = vmatmul.mubr.bf16.gmra.mxu0 %v1455
        %v1545 = vpop.f32.mrf.mxu0
        %v1546 = vadd.f32 0.0, %v1545
        %v1547 = vpop.f32.mrf.mxu0
        %v1548 = vpop.f32.mrf.mxu0
        %v1549 = vadd.f32 0.0, %v1548
        %v1550 = vpop.f32.mrf.mxu0
        %1551 = vmatprep.mubr.bf16.mxu0 0
        %1552 = vmatmul.mubr.bf16.gmra.mxu0 %v1456
        %v1553 = vpop.f32.mrf.mxu0
        %v1554 = vadd.f32 0.0, %v1553
        %v1555 = vpop.f32.mrf.mxu0
        %v1556 = vpop.f32.mrf.mxu0
        %v1557 = vadd.f32 0.0, %v1556
        %v1558 = vpop.f32.mrf.mxu0
        %1559 = vmatprep.mubr.bf16.mxu0 0
        %1560 = vmatmul.mubr.bf16.gmra.mxu0 %v1457
        %v1561 = vpop.f32.mrf.mxu0
        %v1562 = vadd.f32 0.0, %v1561
        %v1563 = vpop.f32.mrf.mxu0
        %v1564 = vpop.f32.mrf.mxu0
        %v1565 = vadd.f32 0.0, %v1564
        %v1566 = vpop.f32.mrf.mxu0
        %1567 = vmatprep.mubr.bf16.mxu0 0
        %1568 = vmatmul.mubr.bf16.gmra.mxu0 %v1458
        %v1569 = vpop.f32.mrf.mxu0
        %v1570 = vadd.f32 0.0, %v1569
        %v1571 = vpop.f32.mrf.mxu0
        %v1572 = vpop.f32.mrf.mxu0
        %v1573 = vadd.f32 0.0, %v1572
        %v1574 = vpop.f32.mrf.mxu0
        %1575 = vdwg.mxu0
        %v1576 = vadd.f32 %v1294, %v1546
        %v1577 = vadd.f32 %v1295, %v1549
        %v1578 = vadd.f32 %v1296, %v1554
        %v1579 = vadd.f32 %v1297, %v1557
        %v1580 = vadd.f32 %v1298, %v1562
        %v1581 = vadd.f32 %v1299, %v1565
        %v1582 = vadd.f32 %v1300, %v1570
        %v1583 = vadd.f32 %v1301, %v1573
        %s1584 = scalar_lea.vmem %s348, 8
        %v1585 = vld [vmem:[%s1584] sm:$0xf]
        %v1586 = vld [vmem:[%s1584 + $0x8] sm:$0xf]
        %v1587 = vld [vmem:[%s1584 + $0x10] sm:$0xf]
        %v1588 = vld [vmem:[%s1584 + $0x18] sm:$0xf]
        %v1589 = vld [vmem:[%s1584 + $0x20] sm:$0xf]
        %v1590 = vld [vmem:[%s1584 + $0x28] sm:$0xf]
        %v1591 = vld [vmem:[%s1584 + $0x30] sm:$0xf]
        %v1592 = vld [vmem:[%s1584 + $0x38] sm:$0xf]
        %s1593 = scalar_lea.vmem %s1, 384
        %v1594 = vld [vmem:[%s1593] sm:$0xf]
        %v1595 = vld [vmem:[%s1593 + $0x4] sm:$0xf]
        %v1596 = vld [vmem:[%s1593 + $0x8] sm:$0xf]
        %v1597 = vld [vmem:[%s1593 + $0xc] sm:$0xf]
        %v1598 = vld [vmem:[%s1593 + $0x10] sm:$0xf]
        %v1599 = vld [vmem:[%s1593 + $0x14] sm:$0xf]
        %v1600 = vld [vmem:[%s1593 + $0x18] sm:$0xf]
        %v1601 = vld [vmem:[%s1593 + $0x1c] sm:$0xf]
        %v1602 = vld [vmem:[%s1593 + $0x20] sm:$0xf]
        %v1603 = vld [vmem:[%s1593 + $0x24] sm:$0xf]
        %v1604 = vld [vmem:[%s1593 + $0x28] sm:$0xf]
        %v1605 = vld [vmem:[%s1593 + $0x2c] sm:$0xf]
        %v1606 = vld [vmem:[%s1593 + $0x30] sm:$0xf]
        %v1607 = vld [vmem:[%s1593 + $0x34] sm:$0xf]
        %v1608 = vld [vmem:[%s1593 + $0x38] sm:$0xf]
        %v1609 = vld [vmem:[%s1593 + $0x3c] sm:$0xf]
        %v1618 = vunpack.c.l.b16 %v1585
        %v1619 = vunpack.c.l.b16 %v1586
        %v1620 = vunpack.c.l.b16 %v1587
        %v1621 = vunpack.c.l.b16 %v1588
        %v1622 = vunpack.c.l.b16 %v1589
        %v1623 = vunpack.c.l.b16 %v1590
        %v1624 = vunpack.c.l.b16 %v1591
        %v1625 = vunpack.c.l.b16 %v1592
        %v1626 = vpack.c.b16 %v1619, %v1618
        %v1627 = vpack.c.b16 %v1621, %v1620
        %v1628 = vpack.c.b16 %v1623, %v1622
        %v1629 = vpack.c.b16 %v1625, %v1624
        %v1650 = vunpack.c.l.b16 %v1594
        %v1651 = vunpack.c.l.b16 %v1595
        %v1652 = vunpack.c.l.b16 %v1596
        %v1653 = vunpack.c.l.b16 %v1597
        %v1654 = vunpack.c.l.b16 %v1598
        %v1655 = vunpack.c.l.b16 %v1599
        %v1656 = vunpack.c.l.b16 %v1600
        %v1657 = vunpack.c.l.b16 %v1601
        %v1658 = vunpack.c.l.b16 %v1602
        %v1659 = vunpack.c.l.b16 %v1603
        %v1660 = vunpack.c.l.b16 %v1604
        %v1661 = vunpack.c.l.b16 %v1605
        %v1662 = vunpack.c.l.b16 %v1606
        %v1663 = vunpack.c.l.b16 %v1607
        %v1664 = vunpack.c.l.b16 %v1608
        %v1665 = vunpack.c.l.b16 %v1609
        %v1666 = vpack.c.b16 %v1651, %v1650
        %v1667 = vpack.c.b16 %v1653, %v1652
        %v1668 = vpack.c.b16 %v1655, %v1654
        %v1669 = vpack.c.b16 %v1657, %v1656
        %v1670 = vpack.c.b16 %v1659, %v1658
        %v1671 = vpack.c.b16 %v1661, %v1660
        %v1672 = vpack.c.b16 %v1663, %v1662
        %v1673 = vpack.c.b16 %v1665, %v1664
        %1682 = vmatprep.subr.bf16.mxu0 0
        %1683 = vmatpush1.bf16.msra.mxu0 %v1673
        %1684 = vmatprep.subr.bf16.mxu0 0
        %1685 = vmatpush1.bf16.msra.mxu0 %v1672
        %1686 = vmatprep.subr.bf16.mxu0 0
        %1687 = vmatpush1.bf16.msra.mxu0 %v1671
        %1688 = vmatprep.subr.bf16.mxu0 0
        %1689 = vmatpush1.bf16.msra.mxu0 %v1670
        %1690 = vmatprep.subr.bf16.mxu0 0
        %1691 = vmatpush1.bf16.msra.mxu0 %v1669
        %1692 = vmatprep.subr.bf16.mxu0 0
        %1693 = vmatpush1.bf16.msra.mxu0 %v1668
        %1694 = vmatprep.subr.bf16.mxu0 0
        %1695 = vmatpush1.bf16.msra.mxu0 %v1667
        %1696 = vmatprep.subr.bf16.mxu0 0
        %1697 = vmatpush1.bf16.msra.mxu0 %v1666
        %1698 = vmatprep.subr.bf16.mxu0 0
        %1699 = vmatpush2.bf16.msra.mxu0 0
        %1700 = vmatprep.subr.bf16.mxu0 0
        %1701 = vmatpush2.bf16.msra.mxu0 0
        %1702 = vmatprep.subr.bf16.mxu0 0
        %1703 = vmatpush2.bf16.msra.mxu0 0
        %1704 = vmatprep.subr.bf16.mxu0 0
        %1705 = vmatpush2.bf16.msra.mxu0 0
        %1706 = vmatprep.subr.bf16.mxu0 0
        %1707 = vmatpush2.bf16.msra.mxu0 0
        %1708 = vmatprep.subr.bf16.mxu0 0
        %1709 = vmatpush2.bf16.msra.mxu0 0
        %1710 = vmatprep.subr.bf16.mxu0 0
        %1711 = vmatpush2.bf16.msra.mxu0 0
        %1712 = vmatprep.subr.bf16.mxu0 0
        %1713 = vmatpush2.bf16.msra.mxu0 0
        %1714 = vmatprep.mubr.bf16.mxu0 0
        %1715 = vmatmul.mubr.bf16.gmra.mxu0 %v1626
        %v1716 = vpop.f32.mrf.mxu0
        %v1717 = vadd.f32 0.0, %v1716
        %v1718 = vpop.f32.mrf.mxu0
        %v1719 = vpop.f32.mrf.mxu0
        %v1720 = vadd.f32 0.0, %v1719
        %v1721 = vpop.f32.mrf.mxu0
        %1722 = vmatprep.mubr.bf16.mxu0 0
        %1723 = vmatmul.mubr.bf16.gmra.mxu0 %v1627
        %v1724 = vpop.f32.mrf.mxu0
        %v1725 = vadd.f32 0.0, %v1724
        %v1726 = vpop.f32.mrf.mxu0
        %v1727 = vpop.f32.mrf.mxu0
        %v1728 = vadd.f32 0.0, %v1727
        %v1729 = vpop.f32.mrf.mxu0
        %1730 = vmatprep.mubr.bf16.mxu0 0
        %1731 = vmatmul.mubr.bf16.gmra.mxu0 %v1628
        %v1732 = vpop.f32.mrf.mxu0
        %v1733 = vadd.f32 0.0, %v1732
        %v1734 = vpop.f32.mrf.mxu0
        %v1735 = vpop.f32.mrf.mxu0
        %v1736 = vadd.f32 0.0, %v1735
        %v1737 = vpop.f32.mrf.mxu0
        %1738 = vmatprep.mubr.bf16.mxu0 0
        %1739 = vmatmul.mubr.bf16.gmra.mxu0 %v1629
        %v1740 = vpop.f32.mrf.mxu0
        %v1741 = vadd.f32 0.0, %v1740
        %v1742 = vpop.f32.mrf.mxu0
        %v1743 = vpop.f32.mrf.mxu0
        %v1744 = vadd.f32 0.0, %v1743
        %v1745 = vpop.f32.mrf.mxu0
        %1746 = vdwg.mxu0
        %v1747 = vadd.f32 %v1576, %v1717
        %v1748 = vadd.f32 %v1577, %v1720
        %v1749 = vadd.f32 %v1578, %v1725
        %v1750 = vadd.f32 %v1579, %v1728
        %v1751 = vadd.f32 %v1580, %v1733
        %v1752 = vadd.f32 %v1581, %v1736
        %v1753 = vadd.f32 %v1582, %v1741
        %v1754 = vadd.f32 %v1583, %v1744
        %s1755 = scalar_lea.vmem %s348, 80
        %v1756 = vld [vmem:[%s1755] sm:$0xf]
        %v1757 = vld [vmem:[%s1755 + $0x8] sm:$0xf]
        %v1758 = vld [vmem:[%s1755 + $0x10] sm:$0xf]
        %v1759 = vld [vmem:[%s1755 + $0x18] sm:$0xf]
        %v1760 = vld [vmem:[%s1755 + $0x20] sm:$0xf]
        %v1761 = vld [vmem:[%s1755 + $0x28] sm:$0xf]
        %v1762 = vld [vmem:[%s1755 + $0x30] sm:$0xf]
        %v1763 = vld [vmem:[%s1755 + $0x38] sm:$0xf]
        %s1764 = scalar_lea.vmem %s1, 448
        %v1765 = vld [vmem:[%s1764] sm:$0xf]
        %v1766 = vld [vmem:[%s1764 + $0x4] sm:$0xf]
        %v1767 = vld [vmem:[%s1764 + $0x8] sm:$0xf]
        %v1768 = vld [vmem:[%s1764 + $0xc] sm:$0xf]
        %v1769 = vld [vmem:[%s1764 + $0x10] sm:$0xf]
        %v1770 = vld [vmem:[%s1764 + $0x14] sm:$0xf]
        %v1771 = vld [vmem:[%s1764 + $0x18] sm:$0xf]
        %v1772 = vld [vmem:[%s1764 + $0x1c] sm:$0xf]
        %v1773 = vld [vmem:[%s1764 + $0x20] sm:$0xf]
        %v1774 = vld [vmem:[%s1764 + $0x24] sm:$0xf]
        %v1775 = vld [vmem:[%s1764 + $0x28] sm:$0xf]
        %v1776 = vld [vmem:[%s1764 + $0x2c] sm:$0xf]
        %v1777 = vld [vmem:[%s1764 + $0x30] sm:$0xf]
        %v1778 = vld [vmem:[%s1764 + $0x34] sm:$0xf]
        %v1779 = vld [vmem:[%s1764 + $0x38] sm:$0xf]
        %v1780 = vld [vmem:[%s1764 + $0x3c] sm:$0xf]
        %v1789 = vunpack.c.l.b16 %v1756
        %v1790 = vunpack.c.l.b16 %v1757
        %v1791 = vunpack.c.l.b16 %v1758
        %v1792 = vunpack.c.l.b16 %v1759
        %v1793 = vunpack.c.l.b16 %v1760
        %v1794 = vunpack.c.l.b16 %v1761
        %v1795 = vunpack.c.l.b16 %v1762
        %v1796 = vunpack.c.l.b16 %v1763
        %v1797 = vpack.c.b16 %v1790, %v1789
        %v1798 = vpack.c.b16 %v1792, %v1791
        %v1799 = vpack.c.b16 %v1794, %v1793
        %v1800 = vpack.c.b16 %v1796, %v1795
        %v1821 = vunpack.c.l.b16 %v1765
        %v1822 = vunpack.c.l.b16 %v1766
        %v1823 = vunpack.c.l.b16 %v1767
        %v1824 = vunpack.c.l.b16 %v1768
        %v1825 = vunpack.c.l.b16 %v1769
        %v1826 = vunpack.c.l.b16 %v1770
        %v1827 = vunpack.c.l.b16 %v1771
        %v1828 = vunpack.c.l.b16 %v1772
        %v1829 = vunpack.c.l.b16 %v1773
        %v1830 = vunpack.c.l.b16 %v1774
        %v1831 = vunpack.c.l.b16 %v1775
        %v1832 = vunpack.c.l.b16 %v1776
        %v1833 = vunpack.c.l.b16 %v1777
        %v1834 = vunpack.c.l.b16 %v1778
        %v1835 = vunpack.c.l.b16 %v1779
        %v1836 = vunpack.c.l.b16 %v1780
        %v1837 = vpack.c.b16 %v1822, %v1821
        %v1838 = vpack.c.b16 %v1824, %v1823
        %v1839 = vpack.c.b16 %v1826, %v1825
        %v1840 = vpack.c.b16 %v1828, %v1827
        %v1841 = vpack.c.b16 %v1830, %v1829
        %v1842 = vpack.c.b16 %v1832, %v1831
        %v1843 = vpack.c.b16 %v1834, %v1833
        %v1844 = vpack.c.b16 %v1836, %v1835
        %1853 = vmatprep.subr.bf16.mxu0 0
        %1854 = vmatpush1.bf16.msra.mxu0 %v1844
        %1855 = vmatprep.subr.bf16.mxu0 0
        %1856 = vmatpush1.bf16.msra.mxu0 %v1843
        %1857 = vmatprep.subr.bf16.mxu0 0
        %1858 = vmatpush1.bf16.msra.mxu0 %v1842
        %1859 = vmatprep.subr.bf16.mxu0 0
        %1860 = vmatpush1.bf16.msra.mxu0 %v1841
        %1861 = vmatprep.subr.bf16.mxu0 0
        %1862 = vmatpush1.bf16.msra.mxu0 %v1840
        %1863 = vmatprep.subr.bf16.mxu0 0
        %1864 = vmatpush1.bf16.msra.mxu0 %v1839
        %1865 = vmatprep.subr.bf16.mxu0 0
        %1866 = vmatpush1.bf16.msra.mxu0 %v1838
        %1867 = vmatprep.subr.bf16.mxu0 0
        %1868 = vmatpush1.bf16.msra.mxu0 %v1837
        %1869 = vmatprep.subr.bf16.mxu0 0
        %1870 = vmatpush2.bf16.msra.mxu0 0
        %1871 = vmatprep.subr.bf16.mxu0 0
        %1872 = vmatpush2.bf16.msra.mxu0 0
        %1873 = vmatprep.subr.bf16.mxu0 0
        %1874 = vmatpush2.bf16.msra.mxu0 0
        %1875 = vmatprep.subr.bf16.mxu0 0
        %1876 = vmatpush2.bf16.msra.mxu0 0
        %1877 = vmatprep.subr.bf16.mxu0 0
        %1878 = vmatpush2.bf16.msra.mxu0 0
        %1879 = vmatprep.subr.bf16.mxu0 0
        %1880 = vmatpush2.bf16.msra.mxu0 0
        %1881 = vmatprep.subr.bf16.mxu0 0
        %1882 = vmatpush2.bf16.msra.mxu0 0
        %1883 = vmatprep.subr.bf16.mxu0 0
        %1884 = vmatpush2.bf16.msra.mxu0 0
        %1885 = vmatprep.mubr.bf16.mxu0 0
        %1886 = vmatmul.mubr.bf16.gmra.mxu0 %v1797
        %v1887 = vpop.f32.mrf.mxu0
        %v1888 = vadd.f32 0.0, %v1887
        %v1889 = vpop.f32.mrf.mxu0
        %v1890 = vpop.f32.mrf.mxu0
        %v1891 = vadd.f32 0.0, %v1890
        %v1892 = vpop.f32.mrf.mxu0
        %1893 = vmatprep.mubr.bf16.mxu0 0
        %1894 = vmatmul.mubr.bf16.gmra.mxu0 %v1798
        %v1895 = vpop.f32.mrf.mxu0
        %v1896 = vadd.f32 0.0, %v1895
        %v1897 = vpop.f32.mrf.mxu0
        %v1898 = vpop.f32.mrf.mxu0
        %v1899 = vadd.f32 0.0, %v1898
        %v1900 = vpop.f32.mrf.mxu0
        %1901 = vmatprep.mubr.bf16.mxu0 0
        %1902 = vmatmul.mubr.bf16.gmra.mxu0 %v1799
        %v1903 = vpop.f32.mrf.mxu0
        %v1904 = vadd.f32 0.0, %v1903
        %v1905 = vpop.f32.mrf.mxu0
        %v1906 = vpop.f32.mrf.mxu0
        %v1907 = vadd.f32 0.0, %v1906
        %v1908 = vpop.f32.mrf.mxu0
        %1909 = vmatprep.mubr.bf16.mxu0 0
        %1910 = vmatmul.mubr.bf16.gmra.mxu0 %v1800
        %v1911 = vpop.f32.mrf.mxu0
        %v1912 = vadd.f32 0.0, %v1911
        %v1913 = vpop.f32.mrf.mxu0
        %v1914 = vpop.f32.mrf.mxu0
        %v1915 = vadd.f32 0.0, %v1914
        %v1916 = vpop.f32.mrf.mxu0
        %1917 = vdwg.mxu0
        %v1918 = vadd.f32 %v1747, %v1888
        %v1919 = vadd.f32 %v1748, %v1891
        %v1920 = vadd.f32 %v1749, %v1896
        %v1921 = vadd.f32 %v1750, %v1899
        %v1922 = vadd.f32 %v1751, %v1904
        %v1923 = vadd.f32 %v1752, %v1907
        %v1924 = vadd.f32 %v1753, %v1912
        %v1925 = vadd.f32 %v1754, %v1915
        %v1926 = vld [vmem:[%s1584] sm:$0xf]
        %v1927 = vld [vmem:[%s1584 + $0x4] sm:$0x1]
        %v1928 = vld [vmem:[%s1584 + $0x8] sm:$0xf]
        %v1929 = vld [vmem:[%s1584 + $0xc] sm:$0x1]
        %v1930 = vld [vmem:[%s1584 + $0x10] sm:$0xf]
        %v1931 = vld [vmem:[%s1584 + $0x14] sm:$0x1]
        %v1932 = vld [vmem:[%s1584 + $0x18] sm:$0xf]
        %v1933 = vld [vmem:[%s1584 + $0x1c] sm:$0x1]
        %v1934 = vld [vmem:[%s1584 + $0x20] sm:$0xf]
        %v1935 = vld [vmem:[%s1584 + $0x24] sm:$0x1]
        %v1936 = vld [vmem:[%s1584 + $0x28] sm:$0xf]
        %v1937 = vld [vmem:[%s1584 + $0x2c] sm:$0x1]
        %v1938 = vld [vmem:[%s1584 + $0x30] sm:$0xf]
        %v1939 = vld [vmem:[%s1584 + $0x34] sm:$0x1]
        %v1940 = vld [vmem:[%s1584 + $0x38] sm:$0xf]
        %v1941 = vld [vmem:[%s1584 + $0x3c] sm:$0x1]
        %v1943 = vshrl.u32 %v1926, 16
        %v1945 = vrot.slane %v1943, 4
        %v1946 = vshll.u32 %v1926, 16
        %v1948 = vrot.slane %v1946, 5
        %v1949 = vor.u32 %v1945, %v1948
        %v1950 = vrot.slane %v1949, 4
        %v1952 = vshll.u32 %v1927, 16
        %v1954 = vrot.slane %v1952, 5
        %v1955 = vsel %vm693, %v1950, %v1954
        %v1957 = vshrl.u32 %v1928, 16
        %v1959 = vrot.slane %v1957, 4
        %v1960 = vshll.u32 %v1928, 16
        %v1962 = vrot.slane %v1960, 5
        %v1963 = vor.u32 %v1959, %v1962
        %v1964 = vrot.slane %v1963, 4
        %v1966 = vshll.u32 %v1929, 16
        %v1968 = vrot.slane %v1966, 5
        %v1969 = vsel %vm693, %v1964, %v1968
        %v1971 = vshrl.u32 %v1930, 16
        %v1973 = vrot.slane %v1971, 4
        %v1974 = vshll.u32 %v1930, 16
        %v1976 = vrot.slane %v1974, 5
        %v1977 = vor.u32 %v1973, %v1976
        %v1978 = vrot.slane %v1977, 4
        %v1980 = vshll.u32 %v1931, 16
        %v1982 = vrot.slane %v1980, 5
        %v1983 = vsel %vm693, %v1978, %v1982
        %v1985 = vshrl.u32 %v1932, 16
        %v1987 = vrot.slane %v1985, 4
        %v1988 = vshll.u32 %v1932, 16
        %v1990 = vrot.slane %v1988, 5
        %v1991 = vor.u32 %v1987, %v1990
        %v1992 = vrot.slane %v1991, 4
        %v1994 = vshll.u32 %v1933, 16
        %v1996 = vrot.slane %v1994, 5
        %v1997 = vsel %vm693, %v1992, %v1996
        %v1999 = vshrl.u32 %v1934, 16
        %v2001 = vrot.slane %v1999, 4
        %v2002 = vshll.u32 %v1934, 16
        %v2004 = vrot.slane %v2002, 5
        %v2005 = vor.u32 %v2001, %v2004
        %v2006 = vrot.slane %v2005, 4
        %v2008 = vshll.u32 %v1935, 16
        %v2010 = vrot.slane %v2008, 5
        %v2011 = vsel %vm693, %v2006, %v2010
        %v2013 = vshrl.u32 %v1936, 16
        %v2015 = vrot.slane %v2013, 4
        %v2016 = vshll.u32 %v1936, 16
        %v2018 = vrot.slane %v2016, 5
        %v2019 = vor.u32 %v2015, %v2018
        %v2020 = vrot.slane %v2019, 4
        %v2022 = vshll.u32 %v1937, 16
        %v2024 = vrot.slane %v2022, 5
        %v2025 = vsel %vm693, %v2020, %v2024
        %v2027 = vshrl.u32 %v1938, 16
        %v2029 = vrot.slane %v2027, 4
        %v2030 = vshll.u32 %v1938, 16
        %v2032 = vrot.slane %v2030, 5
        %v2033 = vor.u32 %v2029, %v2032
        %v2034 = vrot.slane %v2033, 4
        %v2036 = vshll.u32 %v1939, 16
        %v2038 = vrot.slane %v2036, 5
        %v2039 = vsel %vm693, %v2034, %v2038
        %v2041 = vshrl.u32 %v1940, 16
        %v2043 = vrot.slane %v2041, 4
        %v2044 = vshll.u32 %v1940, 16
        %v2046 = vrot.slane %v2044, 5
        %v2047 = vor.u32 %v2043, %v2046
        %v2048 = vrot.slane %v2047, 4
        %v2050 = vshll.u32 %v1941, 16
        %v2052 = vrot.slane %v2050, 5
        %v2053 = vsel %vm693, %v2048, %v2052
        %s2054 = scalar_lea.vmem %s1, 512
        %v2055 = vld [vmem:[%s2054] sm:$0xf]
        %v2056 = vld [vmem:[%s2054 + $0x4] sm:$0xf]
        %v2057 = vld [vmem:[%s2054 + $0x8] sm:$0xf]
        %v2058 = vld [vmem:[%s2054 + $0xc] sm:$0xf]
        %v2059 = vld [vmem:[%s2054 + $0x10] sm:$0xf]
        %v2060 = vld [vmem:[%s2054 + $0x14] sm:$0xf]
        %v2061 = vld [vmem:[%s2054 + $0x18] sm:$0xf]
        %v2062 = vld [vmem:[%s2054 + $0x1c] sm:$0xf]
        %v2063 = vld [vmem:[%s2054 + $0x20] sm:$0xf]
        %v2064 = vld [vmem:[%s2054 + $0x24] sm:$0xf]
        %v2065 = vld [vmem:[%s2054 + $0x28] sm:$0xf]
        %v2066 = vld [vmem:[%s2054 + $0x2c] sm:$0xf]
        %v2067 = vld [vmem:[%s2054 + $0x30] sm:$0xf]
        %v2068 = vld [vmem:[%s2054 + $0x34] sm:$0xf]
        %v2069 = vld [vmem:[%s2054 + $0x38] sm:$0xf]
        %v2070 = vld [vmem:[%s2054 + $0x3c] sm:$0xf]
        %v2071 = vunpack.c.l.b16 %v1955
        %v2072 = vunpack.c.l.b16 %v1969
        %v2073 = vunpack.c.l.b16 %v1983
        %v2074 = vunpack.c.l.b16 %v1997
        %v2075 = vunpack.c.l.b16 %v2011
        %v2076 = vunpack.c.l.b16 %v2025
        %v2077 = vunpack.c.l.b16 %v2039
        %v2078 = vunpack.c.l.b16 %v2053
        %v2079 = vpack.c.b16 %v2072, %v2071
        %v2080 = vpack.c.b16 %v2074, %v2073
        %v2081 = vpack.c.b16 %v2076, %v2075
        %v2082 = vpack.c.b16 %v2078, %v2077
        %v2103 = vunpack.c.l.b16 %v2055
        %v2104 = vunpack.c.l.b16 %v2056
        %v2105 = vunpack.c.l.b16 %v2057
        %v2106 = vunpack.c.l.b16 %v2058
        %v2107 = vunpack.c.l.b16 %v2059
        %v2108 = vunpack.c.l.b16 %v2060
        %v2109 = vunpack.c.l.b16 %v2061
        %v2110 = vunpack.c.l.b16 %v2062
        %v2111 = vunpack.c.l.b16 %v2063
        %v2112 = vunpack.c.l.b16 %v2064
        %v2113 = vunpack.c.l.b16 %v2065
        %v2114 = vunpack.c.l.b16 %v2066
        %v2115 = vunpack.c.l.b16 %v2067
        %v2116 = vunpack.c.l.b16 %v2068
        %v2117 = vunpack.c.l.b16 %v2069
        %v2118 = vunpack.c.l.b16 %v2070
        %v2119 = vpack.c.b16 %v2104, %v2103
        %v2120 = vpack.c.b16 %v2106, %v2105
        %v2121 = vpack.c.b16 %v2108, %v2107
        %v2122 = vpack.c.b16 %v2110, %v2109
        %v2123 = vpack.c.b16 %v2112, %v2111
        %v2124 = vpack.c.b16 %v2114, %v2113
        %v2125 = vpack.c.b16 %v2116, %v2115
        %v2126 = vpack.c.b16 %v2118, %v2117
        %2135 = vmatprep.subr.bf16.mxu0 0
        %2136 = vmatpush1.bf16.msra.mxu0 %v2126
        %2137 = vmatprep.subr.bf16.mxu0 0
        %2138 = vmatpush1.bf16.msra.mxu0 %v2125
        %2139 = vmatprep.subr.bf16.mxu0 0
        %2140 = vmatpush1.bf16.msra.mxu0 %v2124
        %2141 = vmatprep.subr.bf16.mxu0 0
        %2142 = vmatpush1.bf16.msra.mxu0 %v2123
        %2143 = vmatprep.subr.bf16.mxu0 0
        %2144 = vmatpush1.bf16.msra.mxu0 %v2122
        %2145 = vmatprep.subr.bf16.mxu0 0
        %2146 = vmatpush1.bf16.msra.mxu0 %v2121
        %2147 = vmatprep.subr.bf16.mxu0 0
        %2148 = vmatpush1.bf16.msra.mxu0 %v2120
        %2149 = vmatprep.subr.bf16.mxu0 0
        %2150 = vmatpush1.bf16.msra.mxu0 %v2119
        %2151 = vmatprep.subr.bf16.mxu0 0
        %2152 = vmatpush2.bf16.msra.mxu0 0
        %2153 = vmatprep.subr.bf16.mxu0 0
        %2154 = vmatpush2.bf16.msra.mxu0 0
        %2155 = vmatprep.subr.bf16.mxu0 0
        %2156 = vmatpush2.bf16.msra.mxu0 0
        %2157 = vmatprep.subr.bf16.mxu0 0
        %2158 = vmatpush2.bf16.msra.mxu0 0
        %2159 = vmatprep.subr.bf16.mxu0 0
        %2160 = vmatpush2.bf16.msra.mxu0 0
        %2161 = vmatprep.subr.bf16.mxu0 0
        %2162 = vmatpush2.bf16.msra.mxu0 0
        %2163 = vmatprep.subr.bf16.mxu0 0
        %2164 = vmatpush2.bf16.msra.mxu0 0
        %2165 = vmatprep.subr.bf16.mxu0 0
        %2166 = vmatpush2.bf16.msra.mxu0 0
        %2167 = vmatprep.mubr.bf16.mxu0 0
        %2168 = vmatmul.mubr.bf16.gmra.mxu0 %v2079
        %v2169 = vpop.f32.mrf.mxu0
        %v2170 = vadd.f32 0.0, %v2169
        %v2171 = vpop.f32.mrf.mxu0
        %v2172 = vpop.f32.mrf.mxu0
        %v2173 = vadd.f32 0.0, %v2172
        %v2174 = vpop.f32.mrf.mxu0
        %2175 = vmatprep.mubr.bf16.mxu0 0
        %2176 = vmatmul.mubr.bf16.gmra.mxu0 %v2080
        %v2177 = vpop.f32.mrf.mxu0
        %v2178 = vadd.f32 0.0, %v2177
        %v2179 = vpop.f32.mrf.mxu0
        %v2180 = vpop.f32.mrf.mxu0
        %v2181 = vadd.f32 0.0, %v2180
        %v2182 = vpop.f32.mrf.mxu0
        %2183 = vmatprep.mubr.bf16.mxu0 0
        %2184 = vmatmul.mubr.bf16.gmra.mxu0 %v2081
        %v2185 = vpop.f32.mrf.mxu0
        %v2186 = vadd.f32 0.0, %v2185
        %v2187 = vpop.f32.mrf.mxu0
        %v2188 = vpop.f32.mrf.mxu0
        %v2189 = vadd.f32 0.0, %v2188
        %v2190 = vpop.f32.mrf.mxu0
        %2191 = vmatprep.mubr.bf16.mxu0 0
        %2192 = vmatmul.mubr.bf16.gmra.mxu0 %v2082
        %v2193 = vpop.f32.mrf.mxu0
        %v2194 = vadd.f32 0.0, %v2193
        %v2195 = vpop.f32.mrf.mxu0
        %v2196 = vpop.f32.mrf.mxu0
        %v2197 = vadd.f32 0.0, %v2196
        %v2198 = vpop.f32.mrf.mxu0
        %2199 = vdwg.mxu0
        %v2200 = vadd.f32 %v1918, %v2170
        %v2201 = vadd.f32 %v1919, %v2173
        %v2202 = vadd.f32 %v1920, %v2178
        %v2203 = vadd.f32 %v1921, %v2181
        %v2204 = vadd.f32 %v1922, %v2186
        %v2205 = vadd.f32 %v1923, %v2189
        %v2206 = vadd.f32 %v1924, %v2194
        %v2207 = vadd.f32 %v1925, %v2197
        %v2208 = vpack.c.bf16 %v2200, %v2200
        %v2209 = vpack.c.bf16 %v2201, %v2201
        %v2210 = vpack.c.bf16 %v2202, %v2202
        %v2211 = vpack.c.bf16 %v2203, %v2203
        %v2212 = vpack.c.bf16 %v2204, %v2204
        %v2213 = vpack.c.bf16 %v2205, %v2205
        %v2214 = vpack.c.bf16 %v2206, %v2206
        %v2215 = vpack.c.bf16 %v2207, %v2207
        %2216 = vst [vmem:[%s311] sm:$0xf] %v2208
        %2217 = vst [vmem:[%s311 + $0x4] sm:$0xf] %v2209
        %2218 = vst [vmem:[%s311 + $0x8] sm:$0xf] %v2210
        %2219 = vst [vmem:[%s311 + $0xc] sm:$0xf] %v2211
        %2220 = vst [vmem:[%s311 + $0x10] sm:$0xf] %v2212
        %2221 = vst [vmem:[%s311 + $0x14] sm:$0xf] %v2213
        %2222 = vst [vmem:[%s311 + $0x18] sm:$0xf] %v2214
        %2223 = vst [vmem:[%s311 + $0x1c] sm:$0xf] %v2215
        %v2224 = vadd.f32 %v2200, %v2201
        %v2225 = vadd.f32 %v2224, %v2202
        %v2226 = vadd.f32 %v2225, %v2203
        %v2227 = vadd.f32 %v2226, %v2204
        %v2228 = vadd.f32 %v2227, %v2205
        %v2229 = vadd.f32 %v2228, %v2206
        %v2230 = vadd.f32 %v2229, %v2207
        %v2231 = vrot.slane %v2230, 4
        %v2232 = vadd.f32 %v2230, %v2231
        %v2233 = vrot.slane %v2232, 2
        %v2234 = vadd.f32 %v2232, %v2233
        %v2235 = vrot.slane %v2234, 1
        %v2236 = vadd.f32 %v2234, %v2235
        %2237 = vst [vmem:[%s317] sm:$0x1] %v2236
        %v2238 = vmul.f32 %v2200, %v2200
        %v2239 = vmul.f32 %v2201, %v2201
        %v2240 = vmul.f32 %v2202, %v2202
        %v2241 = vmul.f32 %v2203, %v2203
        %v2242 = vmul.f32 %v2204, %v2204
        %v2243 = vmul.f32 %v2205, %v2205
        %v2244 = vmul.f32 %v2206, %v2206
        %v2245 = vmul.f32 %v2207, %v2207
        %v2246 = vadd.f32 %v2238, %v2239
        %v2247 = vadd.f32 %v2246, %v2240
        %v2248 = vadd.f32 %v2247, %v2241
        %v2249 = vadd.f32 %v2248, %v2242
        %v2250 = vadd.f32 %v2249, %v2243
        %v2251 = vadd.f32 %v2250, %v2244
        %v2252 = vadd.f32 %v2251, %v2245
        %v2253 = vrot.slane %v2252, 4
        %v2254 = vadd.f32 %v2252, %v2253
        %v2255 = vrot.slane %v2254, 2
        %v2256 = vadd.f32 %v2254, %v2255
        %v2257 = vrot.slane %v2256, 1
        %v2258 = vadd.f32 %v2256, %v2257
        %2259 = vst [vmem:[%s323] sm:$0x1] %v2258
        %v2260 = vld [vmem:[%s1131] sm:$0xf]
        %v2261 = vld [vmem:[%s1131 + $0x8] sm:$0xf]
        %v2262 = vld [vmem:[%s1131 + $0x10] sm:$0xf]
        %v2263 = vld [vmem:[%s1131 + $0x18] sm:$0xf]
        %v2264 = vld [vmem:[%s1131 + $0x20] sm:$0xf]
        %v2265 = vld [vmem:[%s1131 + $0x28] sm:$0xf]
        %v2266 = vld [vmem:[%s1131 + $0x30] sm:$0xf]
        %v2267 = vld [vmem:[%s1131 + $0x38] sm:$0xf]
        %v2268 = vld [vmem:[%s2] sm:$0xf]
        %v2269 = vld [vmem:[%s2 + $0x4] sm:$0xf]
        %v2270 = vld [vmem:[%s2 + $0x8] sm:$0xf]
        %v2271 = vld [vmem:[%s2 + $0xc] sm:$0xf]
        %v2272 = vld [vmem:[%s2 + $0x10] sm:$0xf]
        %v2273 = vld [vmem:[%s2 + $0x14] sm:$0xf]
        %v2274 = vld [vmem:[%s2 + $0x18] sm:$0xf]
        %v2275 = vld [vmem:[%s2 + $0x1c] sm:$0xf]
        %v2276 = vld [vmem:[%s2 + $0x20] sm:$0xf]
        %v2277 = vld [vmem:[%s2 + $0x24] sm:$0xf]
        %v2278 = vld [vmem:[%s2 + $0x28] sm:$0xf]
        %v2279 = vld [vmem:[%s2 + $0x2c] sm:$0xf]
        %v2280 = vld [vmem:[%s2 + $0x30] sm:$0xf]
        %v2281 = vld [vmem:[%s2 + $0x34] sm:$0xf]
        %v2282 = vld [vmem:[%s2 + $0x38] sm:$0xf]
        %v2283 = vld [vmem:[%s2 + $0x3c] sm:$0xf]
        %v2292 = vunpack.c.l.b16 %v2260
        %v2293 = vunpack.c.l.b16 %v2261
        %v2294 = vunpack.c.l.b16 %v2262
        %v2295 = vunpack.c.l.b16 %v2263
        %v2296 = vunpack.c.l.b16 %v2264
        %v2297 = vunpack.c.l.b16 %v2265
        %v2298 = vunpack.c.l.b16 %v2266
        %v2299 = vunpack.c.l.b16 %v2267
        %v2300 = vpack.c.b16 %v2293, %v2292
        %v2301 = vpack.c.b16 %v2295, %v2294
        %v2302 = vpack.c.b16 %v2297, %v2296
        %v2303 = vpack.c.b16 %v2299, %v2298
        %v2324 = vunpack.c.l.b16 %v2268
        %v2325 = vunpack.c.l.b16 %v2269
        %v2326 = vunpack.c.l.b16 %v2270
        %v2327 = vunpack.c.l.b16 %v2271
        %v2328 = vunpack.c.l.b16 %v2272
        %v2329 = vunpack.c.l.b16 %v2273
        %v2330 = vunpack.c.l.b16 %v2274
        %v2331 = vunpack.c.l.b16 %v2275
        %v2332 = vunpack.c.l.b16 %v2276
        %v2333 = vunpack.c.l.b16 %v2277
        %v2334 = vunpack.c.l.b16 %v2278
        %v2335 = vunpack.c.l.b16 %v2279
        %v2336 = vunpack.c.l.b16 %v2280
        %v2337 = vunpack.c.l.b16 %v2281
        %v2338 = vunpack.c.l.b16 %v2282
        %v2339 = vunpack.c.l.b16 %v2283
        %v2340 = vpack.c.b16 %v2325, %v2324
        %v2341 = vpack.c.b16 %v2327, %v2326
        %v2342 = vpack.c.b16 %v2329, %v2328
        %v2343 = vpack.c.b16 %v2331, %v2330
        %v2344 = vpack.c.b16 %v2333, %v2332
        %v2345 = vpack.c.b16 %v2335, %v2334
        %v2346 = vpack.c.b16 %v2337, %v2336
        %v2347 = vpack.c.b16 %v2339, %v2338
        %2356 = vmatprep.subr.bf16.mxu0 0
        %2357 = vmatpush1.bf16.msra.mxu0 %v2347
        %2358 = vmatprep.subr.bf16.mxu0 0
        %2359 = vmatpush1.bf16.msra.mxu0 %v2346
        %2360 = vmatprep.subr.bf16.mxu0 0
        %2361 = vmatpush1.bf16.msra.mxu0 %v2345
        %2362 = vmatprep.subr.bf16.mxu0 0
        %2363 = vmatpush1.bf16.msra.mxu0 %v2344
        %2364 = vmatprep.subr.bf16.mxu0 0
        %2365 = vmatpush1.bf16.msra.mxu0 %v2343
        %2366 = vmatprep.subr.bf16.mxu0 0
        %2367 = vmatpush1.bf16.msra.mxu0 %v2342
        %2368 = vmatprep.subr.bf16.mxu0 0
        %2369 = vmatpush1.bf16.msra.mxu0 %v2341
        %2370 = vmatprep.subr.bf16.mxu0 0
        %2371 = vmatpush1.bf16.msra.mxu0 %v2340
        %2372 = vmatprep.subr.bf16.mxu0 0
        %2373 = vmatpush2.bf16.msra.mxu0 0
        %2374 = vmatprep.subr.bf16.mxu0 0
        %2375 = vmatpush2.bf16.msra.mxu0 0
        %2376 = vmatprep.subr.bf16.mxu0 0
        %2377 = vmatpush2.bf16.msra.mxu0 0
        %2378 = vmatprep.subr.bf16.mxu0 0
        %2379 = vmatpush2.bf16.msra.mxu0 0
        %2380 = vmatprep.subr.bf16.mxu0 0
        %2381 = vmatpush2.bf16.msra.mxu0 0
        %2382 = vmatprep.subr.bf16.mxu0 0
        %2383 = vmatpush2.bf16.msra.mxu0 0
        %2384 = vmatprep.subr.bf16.mxu0 0
        %2385 = vmatpush2.bf16.msra.mxu0 0
        %2386 = vmatprep.subr.bf16.mxu0 0
        %2387 = vmatpush2.bf16.msra.mxu0 0
        %2388 = vmatprep.mubr.bf16.mxu0 0
        %2389 = vmatmul.mubr.bf16.gmra.mxu0 %v2300
        %v2390 = vpop.f32.mrf.mxu0
        %v2391 = vadd.f32 0.0, %v2390
        %v2392 = vpop.f32.mrf.mxu0
        %v2393 = vpop.f32.mrf.mxu0
        %v2394 = vadd.f32 0.0, %v2393
        %v2395 = vpop.f32.mrf.mxu0
        %2396 = vmatprep.mubr.bf16.mxu0 0
        %2397 = vmatmul.mubr.bf16.gmra.mxu0 %v2301
        %v2398 = vpop.f32.mrf.mxu0
        %v2399 = vadd.f32 0.0, %v2398
        %v2400 = vpop.f32.mrf.mxu0
        %v2401 = vpop.f32.mrf.mxu0
        %v2402 = vadd.f32 0.0, %v2401
        %v2403 = vpop.f32.mrf.mxu0
        %2404 = vmatprep.mubr.bf16.mxu0 0
        %2405 = vmatmul.mubr.bf16.gmra.mxu0 %v2302
        %v2406 = vpop.f32.mrf.mxu0
        %v2407 = vadd.f32 0.0, %v2406
        %v2408 = vpop.f32.mrf.mxu0
        %v2409 = vpop.f32.mrf.mxu0
        %v2410 = vadd.f32 0.0, %v2409
        %v2411 = vpop.f32.mrf.mxu0
        %2412 = vmatprep.mubr.bf16.mxu0 0
        %2413 = vmatmul.mubr.bf16.gmra.mxu0 %v2303
        %v2414 = vpop.f32.mrf.mxu0
        %v2415 = vadd.f32 0.0, %v2414
        %v2416 = vpop.f32.mrf.mxu0
        %v2417 = vpop.f32.mrf.mxu0
        %v2418 = vadd.f32 0.0, %v2417
        %v2419 = vpop.f32.mrf.mxu0
        %2420 = vdwg.mxu0
        %v2421 = vpack.c.bf16 %v2391, %v2391
        %v2422 = vpack.c.bf16 %v2394, %v2394
        %v2423 = vpack.c.bf16 %v2399, %v2399
        %v2424 = vpack.c.bf16 %v2402, %v2402
        %v2425 = vpack.c.bf16 %v2407, %v2407
        %v2426 = vpack.c.bf16 %v2410, %v2410
        %v2427 = vpack.c.bf16 %v2415, %v2415
        %v2428 = vpack.c.bf16 %v2418, %v2418
        %2429 = vst [vmem:[%s330] sm:$0xf] %v2421
        %2430 = vst [vmem:[%s330 + $0x4] sm:$0xf] %v2422
        %2431 = vst [vmem:[%s330 + $0x8] sm:$0xf] %v2423
        %2432 = vst [vmem:[%s330 + $0xc] sm:$0xf] %v2424
        %2433 = vst [vmem:[%s330 + $0x10] sm:$0xf] %v2425
        %2434 = vst [vmem:[%s330 + $0x14] sm:$0xf] %v2426
        %2435 = vst [vmem:[%s330 + $0x18] sm:$0xf] %v2427
        %2436 = vst [vmem:[%s330 + $0x1c] sm:$0xf] %v2428
        %v2437 = vadd.f32 %v2391, %v2394
        %v2438 = vadd.f32 %v2437, %v2399
        %v2439 = vadd.f32 %v2438, %v2402
        %v2440 = vadd.f32 %v2439, %v2407
        %v2441 = vadd.f32 %v2440, %v2410
        %v2442 = vadd.f32 %v2441, %v2415
        %v2443 = vadd.f32 %v2442, %v2418
        %v2444 = vrot.slane %v2443, 4
        %v2445 = vadd.f32 %v2443, %v2444
        %v2446 = vrot.slane %v2445, 2
        %v2447 = vadd.f32 %v2445, %v2446
        %v2448 = vrot.slane %v2447, 1
        %v2449 = vadd.f32 %v2447, %v2448
        %2450 = vst [vmem:[%s336] sm:$0x1] %v2449
        %v2451 = vmul.f32 %v2391, %v2391
        %v2452 = vmul.f32 %v2394, %v2394
        %v2453 = vmul.f32 %v2399, %v2399
        %v2454 = vmul.f32 %v2402, %v2402
        %v2455 = vmul.f32 %v2407, %v2407
        %v2456 = vmul.f32 %v2410, %v2410
        %v2457 = vmul.f32 %v2415, %v2415
        %v2458 = vmul.f32 %v2418, %v2418
        %v2459 = vadd.f32 %v2451, %v2452
        %v2460 = vadd.f32 %v2459, %v2453
        %v2461 = vadd.f32 %v2460, %v2454
        %v2462 = vadd.f32 %v2461, %v2455
        %v2463 = vadd.f32 %v2462, %v2456
        %v2464 = vadd.f32 %v2463, %v2457
        %v2465 = vadd.f32 %v2464, %v2458
        %v2466 = vrot.slane %v2465, 4
        %v2467 = vadd.f32 %v2465, %v2466
        %v2468 = vrot.slane %v2467, 2
        %v2469 = vadd.f32 %v2467, %v2468
        %v2470 = vrot.slane %v2469, 1
        %v2471 = vadd.f32 %v2469, %v2470
        %2472 = vst [vmem:[%s342] sm:$0x1] %v2471
        %s2473 = sand.u32 %s108, 1
        %s2474 = scalar_lea.sflag [#allocation3], %s2473
        %s2475 = sand.u32 %s108, 1
        %s2476 = smul.addr %s2475, 32
        %s2477 = scalar_lea.vmem [#allocation2], %s2476
        %s2478 = sand.u32 %s32, 1
        %s2479 = scalar_lea.sflag [#allocation5], %s2478
        %s2480 = sand.u32 %s134, 1
        %s2481 = scalar_lea.vmem [#allocation4], %s2480
        %s2482 = sand.u32 %s32, 1
        %s2483 = scalar_lea.sflag [#allocation5], %s2482
        %s2484 = sand.u32 %s160, 1
        %s2485 = scalar_lea.vmem [#allocation6], %s2484
        %s2486 = sand.u32 %s32, 1
        %s2487 = scalar_lea.sflag [#allocation8], %s2486
        %s2488 = sand.u32 %s186, 1
        %s2489 = smul.addr %s2488, 32
        %s2490 = scalar_lea.vmem [#allocation7], %s2489
        %s2491 = sand.u32 %s32, 1
        %s2492 = scalar_lea.sflag [#allocation8], %s2491
        %s2493 = sand.u32 %s212, 1
        %s2494 = scalar_lea.vmem [#allocation9], %s2493
        %s2495 = sand.u32 %s238, 1
        %s2496 = scalar_lea.sflag [#allocation11], %s2495
        %s2497 = sand.u32 %s238, 1
        %s2498 = scalar_lea.vmem [#allocation10], %s2497
        // Predicated region
        $region33: #{tpu_custom_call.1} parent=31 // pred_check
          %p2499 = pneg %p118
        $region34: #{tpu_custom_call.1} parent=31 // pred_check_branch
          %2501 = sbr.rel (%p2499) target = $region36
        $region35: #{tpu_custom_call.1} parent=31 // pred_region
          %s2503 = ssub.s32 512, 512
          %2504 = vsyncadd %s2474, %s2503
          %s2505 = smul.addr %s32, 8
          %s2506 = smul.addr %s2505, 64
          %s2507 = scalar_lea.hbm %s3, %s2506
          %s2508 = sshll.u32 %s2477, 4
          %s2509 = int_to_ptr.vmem [resolvable:$true] %s2508
          %2514 = dma.vmem_to_hbm [thread:$0]  %s2509, 512, %s2507, %s2474, 64, 64, 4
        $region36: #{tpu_custom_call.1} parent=31 // pred_fallthru
          _
        // Predicated region
        $region37: #{tpu_custom_call.1} parent=31 // pred_check
          %p2515 = pneg %p144
        $region38: #{tpu_custom_call.1} parent=31 // pred_check_branch
          %2517 = sbr.rel (%p2515) target = $region40
        $region39: #{tpu_custom_call.1} parent=31 // pred_region
          %s2519 = ssub.s32 16, 16
          %2520 = vsyncadd %s2479, %s2519
          %s2521 = smul.addr %s32, 16
          %s2522 = scalar_lea.hbm %s4, %s2521
          %s2524 = sshll.u32 %s2481, 4
          %s2525 = int_to_ptr.vmem [resolvable:$true] %s2524
          %2527 = dma.vmem_to_hbm [thread:$0]  %s2525, 16, %s2522, %s2479
        $region40: #{tpu_custom_call.1} parent=31 // pred_fallthru
          _
        // Predicated region
        $region41: #{tpu_custom_call.1} parent=31 // pred_check
          %p2528 = pneg %p170
        $region42: #{tpu_custom_call.1} parent=31 // pred_check_branch
          %2530 = sbr.rel (%p2528) target = $region44
        $region43: #{tpu_custom_call.1} parent=31 // pred_region
          %s2532 = ssub.s32 16, 16
          %2533 = vsyncadd %s2483, %s2532
          %s2534 = smul.addr %s32, 16
          %s2535 = scalar_lea.hbm %s5, %s2534
          %s2537 = sshll.u32 %s2485, 4
          %s2538 = int_to_ptr.vmem [resolvable:$true] %s2537
          %2540 = dma.vmem_to_hbm [thread:$0]  %s2538, 16, %s2535, %s2483
        $region44: #{tpu_custom_call.1} parent=31 // pred_fallthru
          _
        // Predicated region
        $region45: #{tpu_custom_call.1} parent=31 // pred_check
          %p2541 = pneg %p196
        $region46: #{tpu_custom_call.1} parent=31 // pred_check_branch
          %2543 = sbr.rel (%p2541) target = $region48
        $region47: #{tpu_custom_call.1} parent=31 // pred_region
          %s2545 = ssub.s32 512, 512
          %2546 = vsyncadd %s2487, %s2545
          %s2547 = smul.addr %s32, 8
          %s2548 = smul.addr %s2547, 64
          %s2549 = scalar_lea.hbm %s6, %s2548
          %s2550 = sshll.u32 %s2490, 4
          %s2551 = int_to_ptr.vmem [resolvable:$true] %s2550
          %2556 = dma.vmem_to_hbm [thread:$0]  %s2551, 512, %s2549, %s2487, 64, 64, 4
        $region48: #{tpu_custom_call.1} parent=31 // pred_fallthru
          _
        // Predicated region
        $region49: #{tpu_custom_call.1} parent=31 // pred_check
          %p2557 = pneg %p222
        $region50: #{tpu_custom_call.1} parent=31 // pred_check_branch
          %2559 = sbr.rel (%p2557) target = $region52
        $region51: #{tpu_custom_call.1} parent=31 // pred_region
          %s2561 = ssub.s32 16, 16
          %2562 = vsyncadd %s2492, %s2561
          %s2563 = smul.addr %s32, 16
          %s2564 = scalar_lea.hbm %s7, %s2563
          %s2566 = sshll.u32 %s2494, 4
          %s2567 = int_to_ptr.vmem [resolvable:$true] %s2566
          %2569 = dma.vmem_to_hbm [thread:$0]  %s2567, 16, %s2564, %s2492
        $region52: #{tpu_custom_call.1} parent=31 // pred_fallthru
          _
        // Predicated region
        $region53: #{tpu_custom_call.1} parent=31 // pred_check
          %p2570 = pneg %p248
        $region54: #{tpu_custom_call.1} parent=31 // pred_check_branch
          %2572 = sbr.rel (%p2570) target = $region56
        $region55: #{tpu_custom_call.1} parent=31 // pred_region
          %s2574 = ssub.s32 16, 16
          %2575 = vsyncadd %s2496, %s2574
          %s2576 = smul.addr %s32, 16
          %s2577 = scalar_lea.hbm %s8, %s2576
          %s2579 = sshll.u32 %s2498, 4
          %s2580 = int_to_ptr.vmem [resolvable:$true] %s2579
          %2582 = dma.vmem_to_hbm [thread:$0]  %s2580, 16, %s2577, %s2496
        $region56: #{tpu_custom_call.1} parent=31 // pred_fallthru
          _
      $region32: #{tpu_custom_call.1} parent=5 // pred_fallthru
        _
      %p2583 = scmp.le.s32.totalorder 2, %s27
      // Predicated region
      $region57: #{tpu_custom_call.1} parent=5 // pred_check
        %p2584 = pneg %p2583
      $region58: #{tpu_custom_call.1} parent=5 // pred_check_branch
        %2586 = sbr.rel (%p2584) target = $region60
      $region59: #{tpu_custom_call.1} parent=5 // pred_region
        %s2587 = ssub.s32 %s27, 2
        // Predicated region
        $region61: #{tpu_custom_call.1} parent=59 // pred_check
          %p2588 = pneg %p124
        $region62: #{tpu_custom_call.1} parent=59 // pred_check_branch
          %2590 = sbr.rel (%p2588) target = $region64
        $region63: #{tpu_custom_call.1} parent=59 // pred_region
          %s2591 = sand.u32 %s109, 1
          %s2592 = scalar_lea.sflag [#allocation3], %s2591
          %s2593 = sand.u32 %s109, 1
          %s2594 = smul.addr %s2593, 32
          %s2595 = scalar_lea.vmem [#allocation2], %s2594
          %2596 = dma.done %s2592, 512
        $region64: #{tpu_custom_call.1} parent=59 // pred_fallthru
          _
        // Predicated region
        $region65: #{tpu_custom_call.1} parent=59 // pred_check
          %p2597 = pneg %p150
        $region66: #{tpu_custom_call.1} parent=59 // pred_check_branch
          %2599 = sbr.rel (%p2597) target = $region68
        $region67: #{tpu_custom_call.1} parent=59 // pred_region
          %s2600 = sand.u32 %s33, 1
          %s2601 = scalar_lea.sflag [#allocation5], %s2600
          %s2602 = sand.u32 %s135, 1
          %s2603 = scalar_lea.vmem [#allocation4], %s2602
          %2604 = dma.done %s2601, 16
        $region68: #{tpu_custom_call.1} parent=59 // pred_fallthru
          _
        // Predicated region
        $region69: #{tpu_custom_call.1} parent=59 // pred_check
          %p2605 = pneg %p176
        $region70: #{tpu_custom_call.1} parent=59 // pred_check_branch
          %2607 = sbr.rel (%p2605) target = $region72
        $region71: #{tpu_custom_call.1} parent=59 // pred_region
          %s2608 = sand.u32 %s33, 1
          %s2609 = scalar_lea.sflag [#allocation5], %s2608
          %s2610 = sand.u32 %s161, 1
          %s2611 = scalar_lea.vmem [#allocation6], %s2610
          %2612 = dma.done %s2609, 16
        $region72: #{tpu_custom_call.1} parent=59 // pred_fallthru
          _
        // Predicated region
        $region73: #{tpu_custom_call.1} parent=59 // pred_check
          %p2613 = pneg %p202
        $region74: #{tpu_custom_call.1} parent=59 // pred_check_branch
          %2615 = sbr.rel (%p2613) target = $region76
        $region75: #{tpu_custom_call.1} parent=59 // pred_region
          %s2616 = sand.u32 %s33, 1
          %s2617 = scalar_lea.sflag [#allocation8], %s2616
          %s2618 = sand.u32 %s187, 1
          %s2619 = smul.addr %s2618, 32
          %s2620 = scalar_lea.vmem [#allocation7], %s2619
          %2621 = dma.done %s2617, 512
        $region76: #{tpu_custom_call.1} parent=59 // pred_fallthru
          _
        // Predicated region
        $region77: #{tpu_custom_call.1} parent=59 // pred_check
          %p2622 = pneg %p228
        $region78: #{tpu_custom_call.1} parent=59 // pred_check_branch
          %2624 = sbr.rel (%p2622) target = $region80
        $region79: #{tpu_custom_call.1} parent=59 // pred_region
          %s2625 = sand.u32 %s33, 1
          %s2626 = scalar_lea.sflag [#allocation8], %s2625
          %s2627 = sand.u32 %s213, 1
          %s2628 = scalar_lea.vmem [#allocation9], %s2627
          %2629 = dma.done %s2626, 16
        $region80: #{tpu_custom_call.1} parent=59 // pred_fallthru
          _
        // Predicated region
        $region81: #{tpu_custom_call.1} parent=59 // pred_check
          %p2630 = pneg %p254
        $region82: #{tpu_custom_call.1} parent=59 // pred_check_branch
          %2632 = sbr.rel (%p2630) target = $region84
        $region83: #{tpu_custom_call.1} parent=59 // pred_region
          %s2633 = sand.u32 %s239, 1
          %s2634 = scalar_lea.sflag [#allocation11], %s2633
          %s2635 = sand.u32 %s239, 1
          %s2636 = scalar_lea.vmem [#allocation10], %s2635
          %2637 = dma.done %s2634, 16
        $region84: #{tpu_custom_call.1} parent=59 // pred_fallthru
          _
      $region60: #{tpu_custom_call.1} parent=5 // pred_fallthru
        _
    $region6: #{tpu_custom_call.1} parent=1 // loop_footer
      %s31 = sadd.s32 1, %s27
    $region7: #{tpu_custom_call.1} parent=1 // loop_footer_branch
      %26 = sbr.rel target = $region3
    $region8: #{tpu_custom_call.1} parent=1 // loop_exit
      _
    %2638 = vsyncpa [#allocation3], 1
    %s2639 = scalar_lea.sflag [#allocation3], 1
    %2640 = vsyncpa %s2639, 1
    %2641 = vsyncpa [#allocation5], 1
    %s2642 = scalar_lea.sflag [#allocation5], 1
    %2643 = vsyncpa %s2642, 1
    %2644 = vsyncpa [#allocation8], 1
    %s2645 = scalar_lea.sflag [#allocation8], 1
    %2646 = vsyncpa %s2645, 1
    %2647 = vsyncpa [#allocation11], 1
    %s2648 = scalar_lea.sflag [#allocation11], 1
    %2649 = vsyncpa %s2648, 1

</llo_original>
